<compile_context>
chip_gen: v7x
topology: tpu7x:2x2x1
jax: 0.10.0
libtpu: 0.0.40
codegen_flags: <defaults>
</compile_context>

<pallas_src>
import functools

import jax
import jax.numpy as jnp
from jax import lax
from jax.experimental import pallas as pl
from jax.experimental.pallas import tpu as pltpu


TB = 128  # bags (rows) per grid step.  Do NOT raise to 256 with the
          # register-carried counts matrix (would need a VMEM scratch
          # accumulator to stay under the 64-vreg file).


def _round_up(x, m):
    return (x + m - 1) // m * m


# -----------------------------------------------------------------------------
# Kernel
# -----------------------------------------------------------------------------
def classifier_kernel(idx_ref,           # VMEM (TB, seq) int32 token ids, one bag/row
                      emb_ref,           # VMEM (vocab_p, emb_dim_p)  bf16
                      wh_ref, bh_ref,    # VMEM (emb_dim_p, hidden_p) bf16 / (1, hidden_p) f32
                      wo_ref, bo_ref,    # VMEM (hidden_p, labels_p)  bf16 / (1, labels_p) f32
                      out_ref):          # VMEM (TB, labels_p) f32
    tb, seq = idx_ref.shape
    vocab_p = emb_ref.shape[0]

    # ---- EmbeddingBag(mode='sum'): counts[b, v] = #occurrences of token v in bag b.
    # Built as a value carry (stays in vregs).  Compare/accumulate in f32 (v5e has
    # no bf16 VALU); counts are small integers, so the bf16 cast below is exact.
    # Out-of-range ids (incl. the pad id for padded batch rows) match no lane and
    # therefore contribute exactly zero -- no OOB reads.
    iota = lax.broadcasted_iota(jnp.int32, (tb, vocab_p), 1)
    counts = jnp.zeros((tb, vocab_p), jnp.float32)
    for j in range(seq):                       # static unroll; seq is small & fixed
        tok = idx_ref[:, j:j + 1]              # (tb, 1) int32
        counts = counts + (iota == tok).astype(jnp.float32)

    # bag-sum as a bf16 MXU matmul with f32 accumulation
    bag = jnp.dot(counts.astype(emb_ref.dtype), emb_ref[...],
                  preferred_element_type=jnp.float32)

    # ---- hidden = relu(dropout(bag @ Wh + bh)); dropout is identity in eval ----
    hidden = jnp.dot(bag.astype(wh_ref.dtype), wh_ref[...],
                     preferred_element_type=jnp.float32) + bh_ref[...]
    hidden = jnp.maximum(hidden, 0.0)

    # ---- output = hidden @ Wo + bo ----
    out = jnp.dot(hidden.astype(wo_ref.dtype), wo_ref[...],
                  preferred_element_type=jnp.float32) + bo_ref[...]
    out_ref[...] = out.astype(out_ref.dtype)


# -----------------------------------------------------------------------------
# Feature probe: single-buffered resident blocks (pipeline_mode=pl.Buffered(1))
# -----------------------------------------------------------------------------
@functools.lru_cache(maxsize=1)
def _single_buffer_supported():
    if not hasattr(pl, "Buffered"):
        return False
    try:
        def _k(x_ref, o_ref):
            o_ref[...] = x_ref[...] + 1.0
        fn = pl.pallas_call(
            _k,
            out_shape=jax.ShapeDtypeStruct((8, 128), jnp.float32),
            grid=(2,),
            in_specs=[pl.BlockSpec((8, 128), lambda i: (0, 0),
                                   pipeline_mode=pl.Buffered(1))],
            out_specs=pl.BlockSpec((8, 128), lambda i: (0, 0)),
        )
        y = jax.block_until_ready(fn(jnp.zeros((8, 128), jnp.float32)))
        return bool(jnp.all(y == 1.0))
    except Exception:
        return False


# -----------------------------------------------------------------------------
# One-time (model-load) weight prep + jitted forward
# -----------------------------------------------------------------------------
def make_classifier(emb_table, w_hidden, b_hidden, w_output, b_output,
                    param_dtype=jnp.bfloat16):
    """Returns (forward, forward_single_bag):

      forward(idx)          idx: (B, seq) int32, one bag per row -> (B, num_labels)
      forward_single_bag(X) X: (seq,) int32 (== original forward with offsets=[0])
                            -> (1, num_labels)
    """
    vocab, emb_dim = emb_table.shape
    hidden_dim = w_hidden.shape[0]          # torch layout (out, in)
    num_labels = w_output.shape[0]

    vocab_p = _round_up(vocab, 128)         # lane axis of the in-kernel counts matrix
    emb_dim_p = _round_up(emb_dim, 128)     # lane-dense bag activation / matmul K
    hidden_p = _round_up(hidden_dim, 128)   # lane-dense hidden activation
    labels_p = _round_up(num_labels, 128)   # lane-dense logits -> unmasked stores

    # hoisted glue: pre-transpose to (in, out), zero-pad, cast params to bf16
    emb_pd = jnp.zeros((vocab_p, emb_dim_p), param_dtype).at[:vocab, :emb_dim].set(
        emb_table.astype(param_dtype))
    wh = jnp.zeros((emb_dim_p, hidden_p), param_dtype).at[:emb_dim, :hidden_dim].set(
        w_hidden.T.astype(param_dtype))
    bh = jnp.zeros((1, hidden_p), jnp.float32).at[:, :hidden_dim].set(
        b_hidden.astype(jnp.float32))
    wo = jnp.zeros((hidden_p, labels_p), param_dtype).at[:hidden_dim, :num_labels].set(
        w_output.T.astype(param_dtype))
    bo = jnp.zeros((1, labels_p), jnp.float32).at[:, :num_labels].set(
        b_output.astype(jnp.float32))

    use_buffered = _single_buffer_supported()

    def _resident_spec(shape):
        # Weights/biases never change across the grid; single-buffer them when
        # supported (halves their VMEM allocation vs. default double buffering).
        if use_buffered:
            return pl.BlockSpec(shape, lambda b: (0, 0),
                                pipeline_mode=pl.Buffered(1))
        return pl.BlockSpec(shape, lambda b: (0, 0))

    def _forward(idx):
        idx = idx.astype(jnp.int32)
        B, seq = idx.shape
        B_p = _round_up(B, TB)
        # pad batch rows with an out-of-range token id -> padded bags are inert
        idx_p = jnp.full((B_p, seq), vocab_p, jnp.int32).at[:B, :].set(idx)

        out = pl.pallas_call(
            classifier_kernel,
            out_shape=jax.ShapeDtypeStruct((B_p, labels_p), jnp.float32),
            grid=(B_p // TB,),
            in_specs=[
                pl.BlockSpec((TB, seq), lambda b: (b, 0)),
                _resident_spec((vocab_p, emb_dim_p)),
                _resident_spec((emb_dim_p, hidden_p)),
                _resident_spec((1, hidden_p)),
                _resident_spec((hidden_p, labels_p)),
                _resident_spec((1, labels_p)),
            ],
            out_specs=pl.BlockSpec((TB, labels_p), lambda b: (b, 0)),
            compiler_params=pltpu.CompilerParams(
                dimension_semantics=("parallel",)),
        )(idx_p, emb_pd, wh, bh, wo, bo)

        return out[:B, :num_labels]

    forward = jax.jit(_forward)

    def forward_single_bag(X):
        # matches the original module: a single bag with offsets=[0]
        return forward(X.reshape(1, -1))

    return forward, forward_single_bag


if __name__ == "__main__":
    # small, deterministic shapes consistent with the module
    vocab_size = 64          # embeddings_model.wv.vectors rows
    vector_size = 32         # embeddings_model.vector_size
    hidden_dim = 32          # args.hidden_dim
    num_labels = 8
    seq_len = 8              # token ids per bag
    batch = 144              # > TB so the grid has 2 steps (padding + megacore path)

    key = jax.random.PRNGKey(0)
    k_emb, k_wh, k_bh, k_wo, k_bo, k_idx = jax.random.split(key, 6)

    emb_table = jax.random.normal(k_emb, (vocab_size, vector_size), jnp.float32)
    w_hidden = jax.random.normal(k_wh, (hidden_dim, vector_size), jnp.float32) * 0.1
    b_hidden = jax.random.normal(k_bh, (hidden_dim,), jnp.float32) * 0.1
    w_output = jax.random.normal(k_wo, (num_labels, hidden_dim), jnp.float32) * 0.1
    b_output = jax.random.normal(k_bo, (num_labels,), jnp.float32) * 0.1

    X = jax.random.randint(k_idx, (batch, seq_len), 0, vocab_size, jnp.int32)

    forward, forward_single_bag = make_classifier(
        emb_table, w_hidden, b_hidden, w_output, b_output)

    out = jax.block_until_ready(forward(X))
    assert out.shape == (batch, num_labels)

    # reference #1: exact mirror of the kernel math (bf16 params, f32 accumulation)
    bf = lambda a: a.astype(jnp.bfloat16).astype(jnp.float32)
    bag_q = bf(emb_table)[X].sum(axis=1)
    hid_q = jnp.maximum(bf(bag_q) @ bf(w_hidden).T + b_hidden, 0.0)
    ref_q = bf(hid_q) @ bf(w_output).T + b_output
    assert jnp.allclose(out, ref_q, atol=1e-2, rtol=1e-2)

    # reference #2: original module math in f32 (dropout identity in eval);
    # tolerance loosened to account for the bf16 parameter cast
    bag = emb_table[X].sum(axis=1)
    hid = jnp.maximum(bag @ w_hidden.T + b_hidden, 0.0)
    ref = hid @ w_output.T + b_output
    assert jnp.allclose(out, ref, atol=0.15, rtol=0.05)

    # single-bag path == original module forward(X, offsets=[0])
    out1 = jax.block_until_ready(forward_single_bag(X[0]))
    assert out1.shape == (1, num_labels)
    assert jnp.allclose(out1, ref_q[0:1], atol=1e-2, rtol=1e-2)

    print("KERNEL_OK")
</pallas_src>

<mosaic_0001>
module attributes {stable_mosaic.version = 11 : i64} {
  func.func @_k(%arg0: i32, %arg1: memref<8x128xf32, #tpu.memory_space<vmem>>, %arg2: memref<8x128xf32, #tpu.memory_space<vmem>>) attributes {dimension_semantics = [#tpu.dimension_semantics<arbitrary>], iteration_bounds = array<i64: 2>, scalar_prefetch = 0 : i64, scratch_operands = 0 : i64, tpu.core_type = #tpu.core_type<tc>, window_params = [{pipeline_mode = #tpu.pipeline_mode<synchronous>, transform_indices = @transform_0, window_bounds = array<i64: 8, 128>}, {pipeline_mode = #tpu.pipeline_mode<synchronous>, transform_indices = @transform_1, window_bounds = array<i64: 8, 128>}]} {
    %c0 = arith.constant 0 : index
    %c0_0 = arith.constant 0 : index
    %0 = vector.load %arg1[%c0, %c0_0] : memref<8x128xf32, #tpu.memory_space<vmem>>, vector<8x128xf32>
    %cst = arith.constant 1.000000e+00 : f32
    %1 = vector.broadcast %cst : f32 to vector<8x128xf32>
    %2 = arith.addf %0, %1 : vector<8x128xf32>
    %c0_1 = arith.constant 0 : index
    %c0_2 = arith.constant 0 : index
    %3 = vector.load %arg2[%c0_1, %c0_2] : memref<8x128xf32, #tpu.memory_space<vmem>>, vector<8x128xf32>
    tpu.vector_store %arg2[%c0_1, %c0_2], %2 {strides = array<i32>} : memref<8x128xf32, #tpu.memory_space<vmem>>, vector<8x128xf32>,
    return
  }
  func.func @transform_0(%arg0: i32) -> (i32, i32) {
    %c0_i32 = arith.constant 0 : i32
    %c0_i32_0 = arith.constant 0 : i32
    %c0_i32_1 = arith.constant 0 : i32
    return %c0_i32, %c0_i32_0 : i32, i32
  }
  func.func @transform_1(%arg0: i32) -> (i32, i32) {
    %c0_i32 = arith.constant 0 : i32
    %c0_i32_0 = arith.constant 0 : i32
    %c0_i32_1 = arith.constant 0 : i32
    return %c0_i32, %c0_i32_0 : i32, i32
  }
}

module attributes {stable_mosaic.version = 11 : i64} {
  func.func @classifier_kernel(%arg0: i32, %arg1: memref<128x8xi32, #tpu.memory_space<vmem>>, %arg2: memref<128x128xbf16, #tpu.memory_space<vmem>>, %arg3: memref<128x128xbf16, #tpu.memory_space<vmem>>, %arg4: memref<1x128xf32, #tpu.memory_space<vmem>>, %arg5: memref<128x128xbf16, #tpu.memory_space<vmem>>, %arg6: memref<1x128xf32, #tpu.memory_space<vmem>>, %arg7: memref<128x128xf32, #tpu.memory_space<vmem>>) attributes {dimension_semantics = [#tpu.dimension_semantics<parallel>], iteration_bounds = array<i64: 2>, scalar_prefetch = 0 : i64, scratch_operands = 0 : i64, tpu.core_type = #tpu.core_type<tc>, window_params = [{transform_indices = @transform_0, window_bounds = array<i64: 128, 8>}, {pipeline_mode = #tpu.pipeline_mode<synchronous>, transform_indices = @transform_1, window_bounds = array<i64: 128, 128>}, {pipeline_mode = #tpu.pipeline_mode<synchronous>, transform_indices = @transform_2, window_bounds = array<i64: 128, 128>}, {pipeline_mode = #tpu.pipeline_mode<synchronous>, transform_indices = @transform_3, window_bounds = array<i64: 1, 128>}, {pipeline_mode = #tpu.pipeline_mode<synchronous>, transform_indices = @transform_4, window_bounds = array<i64: 128, 128>}, {pipeline_mode = #tpu.pipeline_mode<synchronous>, transform_indices = @transform_5, window_bounds = array<i64: 1, 128>}, {transform_indices = @transform_6, window_bounds = array<i64: 128, 128>}]} {
    %0 = tpu.iota {dimensions = array<i32: 1>} : vector<128x128xi32>
    %cst = arith.constant 0.000000e+00 : f32
    %1 = vector.broadcast %cst : f32 to vector<128x128xf32>
    %c0 = arith.constant 0 : index
    %c0_0 = arith.constant 0 : index
    %2 = vector.load %arg1[%c0, %c0_0] : memref<128x8xi32, #tpu.memory_space<vmem>>, vector<128x1xi32>
    %3 = vector.broadcast %2 : vector<128x1xi32> to vector<128x128xi32>
    %4 = arith.cmpi eq, %0, %3 : vector<128x128xi32>
    %5 = arith.extui %4 : vector<128x128xi1> to vector<128x128xi32>
    %6 = arith.sitofp %5 : vector<128x128xi32> to vector<128x128xf32>
    %7 = arith.addf %1, %6 : vector<128x128xf32>
    %c0_1 = arith.constant 0 : index
    %c1 = arith.constant 1 : index
    %8 = vector.load %arg1[%c0_1, %c1] : memref<128x8xi32, #tpu.memory_space<vmem>>, vector<128x1xi32>
    %9 = vector.broadcast %8 : vector<128x1xi32> to vector<128x128xi32>
    %10 = arith.cmpi eq, %0, %9 : vector<128x128xi32>
    %11 = arith.extui %10 : vector<128x128xi1> to vector<128x128xi32>
    %12 = arith.sitofp %11 : vector<128x128xi32> to vector<128x128xf32>
    %13 = arith.addf %7, %12 : vector<128x128xf32>
    %c0_2 = arith.constant 0 : index
    %c2 = arith.constant 2 : index
    %14 = vector.load %arg1[%c0_2, %c2] : memref<128x8xi32, #tpu.memory_space<vmem>>, vector<128x1xi32>
    %15 = vector.broadcast %14 : vector<128x1xi32> to vector<128x128xi32>
    %16 = arith.cmpi eq, %0, %15 : vector<128x128xi32>
    %17 = arith.extui %16 : vector<128x128xi1> to vector<128x128xi32>
    %18 = arith.sitofp %17 : vector<128x128xi32> to vector<128x128xf32>
    %19 = arith.addf %13, %18 : vector<128x128xf32>
    %c0_3 = arith.constant 0 : index
    %c3 = arith.constant 3 : index
    %20 = vector.load %arg1[%c0_3, %c3] : memref<128x8xi32, #tpu.memory_space<vmem>>, vector<128x1xi32>
    %21 = vector.broadcast %20 : vector<128x1xi32> to vector<128x128xi32>
    %22 = arith.cmpi eq, %0, %21 : vector<128x128xi32>
    %23 = arith.extui %22 : vector<128x128xi1> to vector<128x128xi32>
    %24 = arith.sitofp %23 : vector<128x128xi32> to vector<128x128xf32>
    %25 = arith.addf %19, %24 : vector<128x128xf32>
    %c0_4 = arith.constant 0 : index
    %c4 = arith.constant 4 : index
    %26 = vector.load %arg1[%c0_4, %c4] : memref<128x8xi32, #tpu.memory_space<vmem>>, vector<128x1xi32>
    %27 = vector.broadcast %26 : vector<128x1xi32> to vector<128x128xi32>
    %28 = arith.cmpi eq, %0, %27 : vector<128x128xi32>
    %29 = arith.extui %28 : vector<128x128xi1> to vector<128x128xi32>
    %30 = arith.sitofp %29 : vector<128x128xi32> to vector<128x128xf32>
    %31 = arith.addf %25, %30 : vector<128x128xf32>
    %c0_5 = arith.constant 0 : index
    %c5 = arith.constant 5 : index
    %32 = vector.load %arg1[%c0_5, %c5] : memref<128x8xi32, #tpu.memory_space<vmem>>, vector<128x1xi32>
    %33 = vector.broadcast %32 : vector<128x1xi32> to vector<128x128xi32>
    %34 = arith.cmpi eq, %0, %33 : vector<128x128xi32>
    %35 = arith.extui %34 : vector<128x128xi1> to vector<128x128xi32>
    %36 = arith.sitofp %35 : vector<128x128xi32> to vector<128x128xf32>
    %37 = arith.addf %31, %36 : vector<128x128xf32>
    %c0_6 = arith.constant 0 : index
    %c6 = arith.constant 6 : index
    %38 = vector.load %arg1[%c0_6, %c6] : memref<128x8xi32, #tpu.memory_space<vmem>>, vector<128x1xi32>
    %39 = vector.broadcast %38 : vector<128x1xi32> to vector<128x128xi32>
    %40 = arith.cmpi eq, %0, %39 : vector<128x128xi32>
    %41 = arith.extui %40 : vector<128x128xi1> to vector<128x128xi32>
    %42 = arith.sitofp %41 : vector<128x128xi32> to vector<128x128xf32>
    %43 = arith.addf %37, %42 : vector<128x128xf32>
    %c0_7 = arith.constant 0 : index
    %c7 = arith.constant 7 : index
    %44 = vector.load %arg1[%c0_7, %c7] : memref<128x8xi32, #tpu.memory_space<vmem>>, vector<128x1xi32>
    %45 = vector.broadcast %44 : vector<128x1xi32> to vector<128x128xi32>
    %46 = arith.cmpi eq, %0, %45 : vector<128x128xi32>
    %47 = arith.extui %46 : vector<128x128xi1> to vector<128x128xi32>
    %48 = arith.sitofp %47 : vector<128x128xi32> to vector<128x128xf32>
    %49 = arith.addf %43, %48 : vector<128x128xf32>
    %50 = arith.truncf %49 : vector<128x128xf32> to vector<128x128xbf16>
    %c0_8 = arith.constant 0 : index
    %c0_9 = arith.constant 0 : index
    %51 = vector.load %arg2[%c0_8, %c0_9] : memref<128x128xbf16, #tpu.memory_space<vmem>>, vector<128x128xbf16>
    %cst_10 = arith.constant dense<0.000000e+00> : vector<128x128xf32>
    %52 = tpu.matmul %50, %51, %cst_10 {dimension_numbers = #tpu.dot_dimension_numbers<[1], [0], [0], [1], [0, 0, 1, 1], [], []>} : vector<128x128xbf16>, vector<128x128xbf16>, vector<128x128xf32> -> vector<128x128xf32>
    %53 = arith.truncf %52 : vector<128x128xf32> to vector<128x128xbf16>
    %c0_11 = arith.constant 0 : index
    %c0_12 = arith.constant 0 : index
    %54 = vector.load %arg3[%c0_11, %c0_12] : memref<128x128xbf16, #tpu.memory_space<vmem>>, vector<128x128xbf16>
    %cst_13 = arith.constant dense<0.000000e+00> : vector<128x128xf32>
    %55 = tpu.matmul %53, %54, %cst_13 {dimension_numbers = #tpu.dot_dimension_numbers<[1], [0], [0], [1], [0, 0, 1, 1], [], []>} : vector<128x128xbf16>, vector<128x128xbf16>, vector<128x128xf32> -> vector<128x128xf32>
    %c0_14 = arith.constant 0 : index
    %c0_15 = arith.constant 0 : index
    %56 = vector.load %arg4[%c0_14, %c0_15] : memref<1x128xf32, #tpu.memory_space<vmem>>, vector<1x128xf32>
    %57 = vector.broadcast %56 : vector<1x128xf32> to vector<128x128xf32>
    %58 = arith.addf %55, %57 : vector<128x128xf32>
    %cst_16 = arith.constant 0.000000e+00 : f32
    %59 = vector.broadcast %cst_16 : f32 to vector<128x128xf32>
    %60 = arith.maximumf %58, %59 : vector<128x128xf32>
    %61 = arith.truncf %60 : vector<128x128xf32> to vector<128x128xbf16>
    %c0_17 = arith.constant 0 : index
    %c0_18 = arith.constant 0 : index
    %62 = vector.load %arg5[%c0_17, %c0_18] : memref<128x128xbf16, #tpu.memory_space<vmem>>, vector<128x128xbf16>
    %cst_19 = arith.constant dense<0.000000e+00> : vector<128x128xf32>
    %63 = tpu.matmul %61, %62, %cst_19 {dimension_numbers = #tpu.dot_dimension_numbers<[1], [0], [0], [1], [0, 0, 1, 1], [], []>} : vector<128x128xbf16>, vector<128x128xbf16>, vector<128x128xf32> -> vector<128x128xf32>
    %c0_20 = arith.constant 0 : index
    %c0_21 = arith.constant 0 : index
    %64 = vector.load %arg6[%c0_20, %c0_21] : memref<1x128xf32, #tpu.memory_space<vmem>>, vector<1x128xf32>
    %65 = vector.broadcast %64 : vector<1x128xf32> to vector<128x128xf32>
    %66 = arith.addf %63, %65 : vector<128x128xf32>
    %c0_22 = arith.constant 0 : index
    %c0_23 = arith.constant 0 : index
    %67 = vector.load %arg7[%c0_22, %c0_23] : memref<128x128xf32, #tpu.memory_space<vmem>>, vector<128x128xf32>
    tpu.vector_store %arg7[%c0_22, %c0_23], %66 {strides = array<i32>} : memref<128x128xf32, #tpu.memory_space<vmem>>, vector<128x128xf32>,
    return
  }
  func.func @transform_0(%arg0: i32) -> (i32, i32) {
    %c0_i32 = arith.constant 0 : i32
    %c0_i32_0 = arith.constant 0 : i32
    return %arg0, %c0_i32 : i32, i32
  }
  func.func @transform_1(%arg0: i32) -> (i32, i32) {
    %c0_i32 = arith.constant 0 : i32
    %c0_i32_0 = arith.constant 0 : i32
    %c0_i32_1 = arith.constant 0 : i32
    return %c0_i32, %c0_i32_0 : i32, i32
  }
  func.func @transform_2(%arg0: i32) -> (i32, i32) {
    %c0_i32 = arith.constant 0 : i32
    %c0_i32_0 = arith.constant 0 : i32
    %c0_i32_1 = arith.constant 0 : i32
    return %c0_i32, %c0_i32_0 : i32, i32
  }
  func.func @transform_3(%arg0: i32) -> (i32, i32) {
    %c0_i32 = arith.constant 0 : i32
    %c0_i32_0 = arith.constant 0 : i32
    %c0_i32_1 = arith.constant 0 : i32
    return %c0_i32, %c0_i32_0 : i32, i32
  }
  func.func @transform_4(%arg0: i32) -> (i32, i32) {
    %c0_i32 = arith.constant 0 : i32
    %c0_i32_0 = arith.constant 0 : i32
    %c0_i32_1 = arith.constant 0 : i32
    return %c0_i32, %c0_i32_0 : i32, i32
  }
  func.func @transform_5(%arg0: i32) -> (i32, i32) {
    %c0_i32 = arith.constant 0 : i32
    %c0_i32_0 = arith.constant 0 : i32
    %c0_i32_1 = arith.constant 0 : i32
    return %c0_i32, %c0_i32_0 : i32, i32
  }
  func.func @transform_6(%arg0: i32) -> (i32, i32) {
    %c0_i32 = arith.constant 0 : i32
    %c0_i32_0 = arith.constant 0 : i32
    return %arg0, %c0_i32 : i32, i32
  }
}

</mosaic_0001>

<llo_original>
// kernel: tpu_custom_call.1
$region0: #{tpu_custom_call.1}
  #allocation0 [shape = 'u32[]', space=smem, size = 0x4, offset = 0x4, fixed_abs, tag = 'smem constant byte address 0x4 - core index']
  #allocation1 [shape = 'u32[144,128]{1,0:T(1,128)}', space=vmem, size = 0x12000, scoped, tag = 'internal scratch']
  %s0 = inlined_call_operand.hbm [shape: f32[8,128], index: 0, kind: input, shape index: {}]
  %s1 = inlined_call_operand.hbm [shape: f32[8,128], index: 1, kind: output, shape index: {}]
  %s2 = sld [smem:[#allocation0]]
  $region41: #{tpu_custom_call.1} parent=0
    _
  %s4 = ssub.s32 1, %s2
  %s5 = scalar_select 0, %s4, %s2
  $region1: #{tpu_custom_call.1} parent=0
    #allocation2 [shape = 'u8[4096]{0}', space=vmem, size = 0x1000, scoped, tag = 'input window, operand 0, single buffered']
    #allocation3 [shape = 's32[2]{0}', space=sflag, size = 0x8, scoped, tag = 'scoped memory for tpu_custom_call.1']
    #allocation4 [shape = 's32[2]{0}', space=sflag, size = 0x8, scoped, tag = 'scoped memory for tpu_custom_call.1']
    #allocation5 [shape = 'u8[4096]{0}', space=vmem, size = 0x1000, scoped, tag = 'output window, operand 0, single buffered']
    %6 = vsyncpa [#allocation3], 0
    %7 = vsyncpa [#allocation4], 0
    loop: start=0, step=1, limit=4
    $region2: #{tpu_custom_call.1} parent=1 // loop_pre_header
      _
    $region3: #{tpu_custom_call.1} parent=1 // loop_header
      %s9 = sphi 0, %s13
      %p10 = scmp.ge.s32.totalorder %s9, 4
      %s17 = sphi 0, %s17
      %s19 = sphi 0, %s17
      %s20 = sphi 0, %s19
      %s34 = sphi 0, %s20
      %s38 = sphi 0, %s38
      %s40 = sphi 0, %s38
      %s41 = sphi 0, %s40
      %s55 = sphi 0, %s41
    $region4: #{tpu_custom_call.1} parent=1 // loop_header_branch
      %12 = sbr.rel (%p10) target = $region8
    $region5: #{tpu_custom_call.1} parent=1 // loop_body
      %s14 = ssub.s32 %s9, 1
      %s15 = ssub.s32 %s9, 2
      %s16 = sadd.s32 %s9, 1
      %s18 = sadd.s32 %s17, 1
      %p21 = scmp.eq.s32.totalorder %s9, 1
      %p22 = scmp.ne.s32.totalorder %s17, %s19
      %p23 = scmp.eq.s32.totalorder %s9, 0
      %p24 = por %p22, %p23
      %p25 = scmp.ne.s32.totalorder %s17, %s19
      %p26 = scmp.eq.s32.totalorder %s14, 1
      %p27 = por %p25, %p26
      %p28 = scmp.ne.s32.totalorder %s19, %s20
      %p29 = scmp.eq.s32.totalorder %s14, 0
      %p30 = por %p28, %p29
      %p31 = scmp.ne.s32.totalorder %s19, %s20
      %p32 = scmp.eq.s32.totalorder %s15, 1
      %p33 = por %p31, %p32
      %p35 = scmp.ne.s32.totalorder %s20, %s34
      %p36 = scmp.eq.s32.totalorder %s15, 0
      %p37 = por %p35, %p36
      %s39 = sadd.s32 %s38, 1
      %p42 = scmp.eq.s32.totalorder %s9, 1
      %p43 = scmp.ne.s32.totalorder %s38, %s40
      %p44 = scmp.eq.s32.totalorder %s9, 0
      %p45 = por %p43, %p44
      %p46 = scmp.ne.s32.totalorder %s38, %s40
      %p47 = scmp.eq.s32.totalorder %s14, 1
      %p48 = por %p46, %p47
      %p49 = scmp.ne.s32.totalorder %s40, %s41
      %p50 = scmp.eq.s32.totalorder %s14, 0
      %p51 = por %p49, %p50
      %p52 = scmp.ne.s32.totalorder %s40, %s41
      %p53 = scmp.eq.s32.totalorder %s15, 1
      %p54 = por %p52, %p53
      %p56 = scmp.ne.s32.totalorder %s41, %s55
      %p57 = scmp.eq.s32.totalorder %s15, 0
      %p58 = por %p56, %p57
      %p59 = scmp.le.s32.totalorder 1, %s9
      %p60 = scmp.lt.s32.totalorder %s9, 3
      %p61 = pnand %p59, %p60
      %p62 = pneg %p61
      // Predicated region
      $region9: #{tpu_custom_call.1} parent=5 // pred_check
        _
      $region10: #{tpu_custom_call.1} parent=5 // pred_check_branch
        %64 = sbr.rel (%p61) target = $region12
      $region11: #{tpu_custom_call.1} parent=5 // pred_region
        %s65 = ssub.s32 %s9, 1
        // Predicated region
        $region13: #{tpu_custom_call.1} parent=11 // pred_check
          %p66 = pneg %p30
        $region14: #{tpu_custom_call.1} parent=11 // pred_check_branch
          %68 = sbr.rel (%p66) target = $region16
        $region15: #{tpu_custom_call.1} parent=11 // pred_region
          %s70 = ssub.s32 128, 128
          %71 = vsyncadd [#allocation3], %s70
          %s73 = sshll.u32 [#allocation2], 4
          %s74 = int_to_ptr.vmem [resolvable:$true] %s73
          %76 = dma.hbm_to_vmem [thread:$0]  %s0, 128, %s74, [#allocation3]
        $region16: #{tpu_custom_call.1} parent=11 // pred_fallthru
          _
      $region12: #{tpu_custom_call.1} parent=5 // pred_fallthru
        _
      %p77 = scmp.lt.s32.totalorder %s9, 2
      // Predicated region
      $region17: #{tpu_custom_call.1} parent=5 // pred_check
        %p78 = pneg %p77
      $region18: #{tpu_custom_call.1} parent=5 // pred_check_branch
        %80 = sbr.rel (%p78) target = $region20
      $region19: #{tpu_custom_call.1} parent=5 // pred_region
        _
      $region20: #{tpu_custom_call.1} parent=5 // pred_fallthru
        _
      %p81 = scmp.le.s32.totalorder 1, %s9
      %p82 = scmp.lt.s32.totalorder %s9, 3
      %p83 = pnand %p81, %p82
      %p84 = pneg %p83
      // Predicated region
      $region21: #{tpu_custom_call.1} parent=5 // pred_check
        _
      $region22: #{tpu_custom_call.1} parent=5 // pred_check_branch
        %86 = sbr.rel (%p83) target = $region24
      $region23: #{tpu_custom_call.1} parent=5 // pred_region
        %s87 = ssub.s32 %s9, 1
        // Predicated region
        $region25: #{tpu_custom_call.1} parent=23 // pred_check
          %p88 = pneg %p30
        $region26: #{tpu_custom_call.1} parent=23 // pred_check_branch
          %90 = sbr.rel (%p88) target = $region28
        $region27: #{tpu_custom_call.1} parent=23 // pred_region
          %91 = dma.done [#allocation3], 128
        $region28: #{tpu_custom_call.1} parent=23 // pred_fallthru
          _
        %p92 = pneg %p30
        %p93 = pneg %p27
        %p94 = pneg %p51
        %p95 = pneg %p48
        %v96 = vld [vmem:[#allocation2] sm:$0xff]
        %v97 = vadd.f32 %v96, 1.0
        %98 = vst [vmem:[#allocation5] sm:$0xff] %v97
        // Predicated region
        $region29: #{tpu_custom_call.1} parent=23 // pred_check
          %p99 = pneg %p48
        $region30: #{tpu_custom_call.1} parent=23 // pred_check_branch
          %101 = sbr.rel (%p99) target = $region32
        $region31: #{tpu_custom_call.1} parent=23 // pred_region
          %s103 = ssub.s32 128, 128
          %104 = vsyncadd [#allocation4], %s103
          %s106 = sshll.u32 [#allocation5], 4
          %s107 = int_to_ptr.vmem [resolvable:$true] %s106
          %109 = dma.vmem_to_hbm [thread:$0]  %s107, 128, %s1, [#allocation4]
        $region32: #{tpu_custom_call.1} parent=23 // pred_fallthru
          _
        // Predicated region
        $region33: #{tpu_custom_call.1} parent=23 // pred_check
          %p110 = pneg %p48
        $region34: #{tpu_custom_call.1} parent=23 // pred_check_branch
          %112 = sbr.rel (%p110) target = $region36
        $region35: #{tpu_custom_call.1} parent=23 // pred_region
          %113 = dma.done [#allocation4], 128
        $region36: #{tpu_custom_call.1} parent=23 // pred_fallthru
          _
      $region24: #{tpu_custom_call.1} parent=5 // pred_fallthru
        _
      %p114 = scmp.le.s32.totalorder 2, %s9
      // Predicated region
      $region37: #{tpu_custom_call.1} parent=5 // pred_check
        %p115 = pneg %p114
      $region38: #{tpu_custom_call.1} parent=5 // pred_check_branch
        %117 = sbr.rel (%p115) target = $region40
      $region39: #{tpu_custom_call.1} parent=5 // pred_region
        %s118 = ssub.s32 %s9, 2
      $region40: #{tpu_custom_call.1} parent=5 // pred_fallthru
        _
    $region6: #{tpu_custom_call.1} parent=1 // loop_footer
      %s13 = sadd.s32 1, %s9
    $region7: #{tpu_custom_call.1} parent=1 // loop_footer_branch
      %8 = sbr.rel target = $region3
    $region8: #{tpu_custom_call.1} parent=1 // loop_exit
      _
    %119 = vsyncpa [#allocation3], 1
    %s120 = scalar_lea.sflag [#allocation3], 1
    %121 = vsyncpa %s120, 1
    %122 = vsyncpa [#allocation4], 1
    %s123 = scalar_lea.sflag [#allocation4], 1
    %124 = vsyncpa %s123, 1

// kernel: _forward.1
$region0: #{_forward.1}
  #allocation0 [shape = 'u32[]', space=smem, size = 0x4, offset = 0x4, fixed_abs, tag = 'smem constant byte address 0x4 - core index']
  #allocation1 [shape = 'u32[144,128]{1,0:T(1,128)}', space=vmem, size = 0x12000, scoped, tag = 'internal scratch']
  %s0 = inlined_call_operand.vmem [shape: s32[256,8], index: 0, kind: input, shape index: {}]
  %s1 = inlined_call_operand.vmem [shape: bf16[128,128], index: 1, kind: input, shape index: {}]
  %s2 = inlined_call_operand.vmem [shape: bf16[128,128], index: 2, kind: input, shape index: {}]
  %s3 = inlined_call_operand.vmem [shape: f32[1,128], index: 3, kind: input, shape index: {}]
  %s4 = inlined_call_operand.vmem [shape: bf16[128,128], index: 4, kind: input, shape index: {}]
  %s5 = inlined_call_operand.vmem [shape: f32[1,128], index: 5, kind: input, shape index: {}]
  %s6 = inlined_call_operand.vmem [shape: f32[256,128], index: 6, kind: output, shape index: {}]
  %s7 = sld [smem:[#allocation0]]
  $region57: #{_forward.1} parent=0
    _
  %s9 = ssub.s32 1, %s7
  %s10 = scalar_select 0, %s9, %s7
  loop: start=0, step=1, limit=4
  $region2: #{_forward.1} parent=0 // loop_pre_header
    _
  $region3: #{_forward.1} parent=0 // loop_header
    %s12 = sphi 0, %s16
    %p13 = scmp.ge.s32.totalorder %s12, 4
    %s22 = sphi 0, %s24
    %s25 = sphi 0, %s22
    %s26 = sphi 0, %s25
    %s42 = sphi 0, %s26
    %s46 = sphi 0, %s46
    %s48 = sphi 0, %s46
    %s49 = sphi 0, %s48
    %s63 = sphi 0, %s49
    %s67 = sphi 0, %s67
    %s69 = sphi 0, %s67
    %s70 = sphi 0, %s69
    %s84 = sphi 0, %s70
    %s88 = sphi 0, %s88
    %s90 = sphi 0, %s88
    %s91 = sphi 0, %s90
    %s105 = sphi 0, %s91
    %s109 = sphi 0, %s109
    %s111 = sphi 0, %s109
    %s112 = sphi 0, %s111
    %s126 = sphi 0, %s112
    %s130 = sphi 0, %s130
    %s132 = sphi 0, %s130
    %s133 = sphi 0, %s132
    %s147 = sphi 0, %s133
    %s153 = sphi 0, %s155
    %s156 = sphi 0, %s153
    %s157 = sphi 0, %s156
    %s173 = sphi 0, %s157
  $region4: #{_forward.1} parent=0 // loop_header_branch
    %15 = sbr.rel (%p13) target = $region8
  $region5: #{_forward.1} parent=0 // loop_body
    %s17 = ssub.s32 %s12, 1
    %s18 = ssub.s32 %s12, 2
    %s19 = sadd.s32 %s12, 1
    %s20 = ssub.s32 %s12, %s19
    %p21 = scmp.eq.s32.totalorder %s20, 0
    %s23 = sadd.s32 %s22, 1
    %s24 = scalar_select %p21, %s22, %s23
    %p27 = pneg %p21
    %p28 = scmp.eq.s32.totalorder %s12, 1
    %p29 = por %p27, %p28
    %p30 = scmp.ne.s32.totalorder %s22, %s25
    %p31 = scmp.eq.s32.totalorder %s12, 0
    %p32 = por %p30, %p31
    %p33 = scmp.ne.s32.totalorder %s22, %s25
    %p34 = scmp.eq.s32.totalorder %s17, 1
    %p35 = por %p33, %p34
    %p36 = scmp.ne.s32.totalorder %s25, %s26
    %p37 = scmp.eq.s32.totalorder %s17, 0
    %p38 = por %p36, %p37
    %p39 = scmp.ne.s32.totalorder %s25, %s26
    %p40 = scmp.eq.s32.totalorder %s18, 1
    %p41 = por %p39, %p40
    %p43 = scmp.ne.s32.totalorder %s26, %s42
    %p44 = scmp.eq.s32.totalorder %s18, 0
    %p45 = por %p43, %p44
    %s47 = sadd.s32 %s46, 1
    %p50 = scmp.eq.s32.totalorder %s12, 1
    %p51 = scmp.ne.s32.totalorder %s46, %s48
    %p52 = scmp.eq.s32.totalorder %s12, 0
    %p53 = por %p51, %p52
    %p54 = scmp.ne.s32.totalorder %s46, %s48
    %p55 = scmp.eq.s32.totalorder %s17, 1
    %p56 = por %p54, %p55
    %p57 = scmp.ne.s32.totalorder %s48, %s49
    %p58 = scmp.eq.s32.totalorder %s17, 0
    %p59 = por %p57, %p58
    %p60 = scmp.ne.s32.totalorder %s48, %s49
    %p61 = scmp.eq.s32.totalorder %s18, 1
    %p62 = por %p60, %p61
    %p64 = scmp.ne.s32.totalorder %s49, %s63
    %p65 = scmp.eq.s32.totalorder %s18, 0
    %p66 = por %p64, %p65
    %s68 = sadd.s32 %s67, 1
    %p71 = scmp.eq.s32.totalorder %s12, 1
    %p72 = scmp.ne.s32.totalorder %s67, %s69
    %p73 = scmp.eq.s32.totalorder %s12, 0
    %p74 = por %p72, %p73
    %p75 = scmp.ne.s32.totalorder %s67, %s69
    %p76 = scmp.eq.s32.totalorder %s17, 1
    %p77 = por %p75, %p76
    %p78 = scmp.ne.s32.totalorder %s69, %s70
    %p79 = scmp.eq.s32.totalorder %s17, 0
    %p80 = por %p78, %p79
    %p81 = scmp.ne.s32.totalorder %s69, %s70
    %p82 = scmp.eq.s32.totalorder %s18, 1
    %p83 = por %p81, %p82
    %p85 = scmp.ne.s32.totalorder %s70, %s84
    %p86 = scmp.eq.s32.totalorder %s18, 0
    %p87 = por %p85, %p86
    %s89 = sadd.s32 %s88, 1
    %p92 = scmp.eq.s32.totalorder %s12, 1
    %p93 = scmp.ne.s32.totalorder %s88, %s90
    %p94 = scmp.eq.s32.totalorder %s12, 0
    %p95 = por %p93, %p94
    %p96 = scmp.ne.s32.totalorder %s88, %s90
    %p97 = scmp.eq.s32.totalorder %s17, 1
    %p98 = por %p96, %p97
    %p99 = scmp.ne.s32.totalorder %s90, %s91
    %p100 = scmp.eq.s32.totalorder %s17, 0
    %p101 = por %p99, %p100
    %p102 = scmp.ne.s32.totalorder %s90, %s91
    %p103 = scmp.eq.s32.totalorder %s18, 1
    %p104 = por %p102, %p103
    %p106 = scmp.ne.s32.totalorder %s91, %s105
    %p107 = scmp.eq.s32.totalorder %s18, 0
    %p108 = por %p106, %p107
    %s110 = sadd.s32 %s109, 1
    %p113 = scmp.eq.s32.totalorder %s12, 1
    %p114 = scmp.ne.s32.totalorder %s109, %s111
    %p115 = scmp.eq.s32.totalorder %s12, 0
    %p116 = por %p114, %p115
    %p117 = scmp.ne.s32.totalorder %s109, %s111
    %p118 = scmp.eq.s32.totalorder %s17, 1
    %p119 = por %p117, %p118
    %p120 = scmp.ne.s32.totalorder %s111, %s112
    %p121 = scmp.eq.s32.totalorder %s17, 0
    %p122 = por %p120, %p121
    %p123 = scmp.ne.s32.totalorder %s111, %s112
    %p124 = scmp.eq.s32.totalorder %s18, 1
    %p125 = por %p123, %p124
    %p127 = scmp.ne.s32.totalorder %s112, %s126
    %p128 = scmp.eq.s32.totalorder %s18, 0
    %p129 = por %p127, %p128
    %s131 = sadd.s32 %s130, 1
    %p134 = scmp.eq.s32.totalorder %s12, 1
    %p135 = scmp.ne.s32.totalorder %s130, %s132
    %p136 = scmp.eq.s32.totalorder %s12, 0
    %p137 = por %p135, %p136
    %p138 = scmp.ne.s32.totalorder %s130, %s132
    %p139 = scmp.eq.s32.totalorder %s17, 1
    %p140 = por %p138, %p139
    %p141 = scmp.ne.s32.totalorder %s132, %s133
    %p142 = scmp.eq.s32.totalorder %s17, 0
    %p143 = por %p141, %p142
    %p144 = scmp.ne.s32.totalorder %s132, %s133
    %p145 = scmp.eq.s32.totalorder %s18, 1
    %p146 = por %p144, %p145
    %p148 = scmp.ne.s32.totalorder %s133, %s147
    %p149 = scmp.eq.s32.totalorder %s18, 0
    %p150 = por %p148, %p149
    %s151 = ssub.s32 %s12, %s19
    %p152 = scmp.eq.s32.totalorder %s151, 0
    %s154 = sadd.s32 %s153, 1
    %s155 = scalar_select %p152, %s153, %s154
    %p158 = pneg %p152
    %p159 = scmp.eq.s32.totalorder %s12, 1
    %p160 = por %p158, %p159
    %p161 = scmp.ne.s32.totalorder %s153, %s156
    %p162 = scmp.eq.s32.totalorder %s12, 0
    %p163 = por %p161, %p162
    %p164 = scmp.ne.s32.totalorder %s153, %s156
    %p165 = scmp.eq.s32.totalorder %s17, 1
    %p166 = por %p164, %p165
    %p167 = scmp.ne.s32.totalorder %s156, %s157
    %p168 = scmp.eq.s32.totalorder %s17, 0
    %p169 = por %p167, %p168
    %p170 = scmp.ne.s32.totalorder %s156, %s157
    %p171 = scmp.eq.s32.totalorder %s18, 1
    %p172 = por %p170, %p171
    %p174 = scmp.ne.s32.totalorder %s157, %s173
    %p175 = scmp.eq.s32.totalorder %s18, 0
    %p176 = por %p174, %p175
    %p177 = scmp.le.s32.totalorder 1, %s12
    %p178 = scmp.lt.s32.totalorder %s12, 3
    %p179 = pnand %p177, %p178
    %p180 = pneg %p179
    // Predicated region
    $region9: #{_forward.1} parent=5 // pred_check
      _
    $region10: #{_forward.1} parent=5 // pred_check_branch
      %182 = sbr.rel (%p179) target = $region12
    $region11: #{_forward.1} parent=5 // pred_region
      %s183 = ssub.s32 %s12, 1
      // Predicated region
      $region13: #{_forward.1} parent=11 // pred_check
        %p184 = pneg %p59
      $region14: #{_forward.1} parent=11 // pred_check_branch
        %186 = sbr.rel (%p184) target = $region16
      $region15: #{_forward.1} parent=11 // pred_region
        _
      $region16: #{_forward.1} parent=11 // pred_fallthru
        _
      // Predicated region
      $region17: #{_forward.1} parent=11 // pred_check
        %p187 = pneg %p80
      $region18: #{_forward.1} parent=11 // pred_check_branch
        %189 = sbr.rel (%p187) target = $region20
      $region19: #{_forward.1} parent=11 // pred_region
        _
      $region20: #{_forward.1} parent=11 // pred_fallthru
        _
      // Predicated region
      $region21: #{_forward.1} parent=11 // pred_check
        %p190 = pneg %p101
      $region22: #{_forward.1} parent=11 // pred_check_branch
        %192 = sbr.rel (%p190) target = $region24
      $region23: #{_forward.1} parent=11 // pred_region
        _
      $region24: #{_forward.1} parent=11 // pred_fallthru
        _
      // Predicated region
      $region25: #{_forward.1} parent=11 // pred_check
        %p193 = pneg %p122
      $region26: #{_forward.1} parent=11 // pred_check_branch
        %195 = sbr.rel (%p193) target = $region28
      $region27: #{_forward.1} parent=11 // pred_region
        _
      $region28: #{_forward.1} parent=11 // pred_fallthru
        _
      // Predicated region
      $region29: #{_forward.1} parent=11 // pred_check
        %p196 = pneg %p143
      $region30: #{_forward.1} parent=11 // pred_check_branch
        %198 = sbr.rel (%p196) target = $region32
      $region31: #{_forward.1} parent=11 // pred_region
        _
      $region32: #{_forward.1} parent=11 // pred_fallthru
        _
    $region12: #{_forward.1} parent=5 // pred_fallthru
      _
    %p199 = scmp.lt.s32.totalorder %s12, 2
    // Predicated region
    $region33: #{_forward.1} parent=5 // pred_check
      %p200 = pneg %p199
    $region34: #{_forward.1} parent=5 // pred_check_branch
      %202 = sbr.rel (%p200) target = $region36
    $region35: #{_forward.1} parent=5 // pred_region
      // Predicated region
      $region37: #{_forward.1} parent=35 // pred_check
        %p203 = pneg %p32
      $region38: #{_forward.1} parent=35 // pred_check_branch
        %205 = sbr.rel (%p203) target = $region40
      $region39: #{_forward.1} parent=35 // pred_region
        %s206 = smul.u32 16, %s12
        %p207 = scmp.lt.s32.totalorder %s206, 31
        %s208 = scalar_select %p207, %s206, 31
        %s209 = smul.addr %s208, 8
        %s210 = scalar_lea.vmem %s0, %s209
        %s211 = smul.u32 16, %s12
      $region40: #{_forward.1} parent=35 // pred_fallthru
        _
    $region36: #{_forward.1} parent=5 // pred_fallthru
      _
    %p212 = scmp.le.s32.totalorder 1, %s12
    %p213 = scmp.lt.s32.totalorder %s12, 3
    %p214 = pnand %p212, %p213
    %p215 = pneg %p214
    // Predicated region
    $region41: #{_forward.1} parent=5 // pred_check
      _
    $region42: #{_forward.1} parent=5 // pred_check_branch
      %217 = sbr.rel (%p214) target = $region44
    $region43: #{_forward.1} parent=5 // pred_region
      %s218 = ssub.s32 %s12, 1
      %s219 = smul.u32 16, %s17
      %p220 = scmp.lt.s32.totalorder %s219, 31
      %s221 = scalar_select %p220, %s219, 31
      %s222 = smul.addr %s221, 8
      %s223 = scalar_lea.vmem %s0, %s222
      %p224 = pneg %p38
      %p225 = pneg %p35
      %p226 = pneg %p59
      %p227 = pneg %p56
      %p228 = pneg %p80
      %p229 = pneg %p77
      %p230 = pneg %p101
      %p231 = pneg %p98
      %p232 = pneg %p122
      %p233 = pneg %p119
      %p234 = pneg %p143
      %p235 = pneg %p140
      %p236 = pneg %p169
      %p237 = pneg %p166
      %s238 = smul.u32 16, %s17
      %p239 = scmp.lt.s32.totalorder %s238, 31
      %s240 = scalar_select %p239, %s238, 31
      %s241 = smul.addr %s240, 8
      %s242 = scalar_lea.vmem %s6, %s241
      %s243 = smul.u32 16, %s17
      %p244 = scmp.lt.s32.totalorder %s243, 31
      %s245 = scalar_select %p244, %s243, 31
      %s246 = smul.addr %s245, 8
      %s247 = scalar_lea.vmem %s0, %s246
      %s248 = smul.u32 16, %s17
      %s249 = smul.u32 16, %s17
      %p250 = scmp.lt.s32.totalorder %s249, 31
      %s251 = scalar_select %p250, %s249, 31
      %s252 = smul.addr %s251, 8
      %s253 = scalar_lea.vmem %s6, %s252
      %s254 = smul.u32 16, %s17
      %v256 = vlaneseq
      %v257 = vand.u32 %v256, 127
      %v258 = vld [vmem:[%s247] sm:$0xff]
      %v259 = vld [vmem:[%s247 + $0x8] sm:$0xff]
      %v260 = vld [vmem:[%s247 + $0x10] sm:$0xff]
      %v261 = vld [vmem:[%s247 + $0x18] sm:$0xff]
      %v262 = vld [vmem:[%s247 + $0x20] sm:$0xff]
      %v263 = vld [vmem:[%s247 + $0x28] sm:$0xff]
      %v264 = vld [vmem:[%s247 + $0x30] sm:$0xff]
      %v265 = vld [vmem:[%s247 + $0x38] sm:$0xff]
      %v266 = vld [vmem:[%s247 + $0x40] sm:$0xff]
      %v267 = vld [vmem:[%s247 + $0x48] sm:$0xff]
      %v268 = vld [vmem:[%s247 + $0x50] sm:$0xff]
      %v269 = vld [vmem:[%s247 + $0x58] sm:$0xff]
      %v270 = vld [vmem:[%s247 + $0x60] sm:$0xff]
      %v271 = vld [vmem:[%s247 + $0x68] sm:$0xff]
      %v272 = vld [vmem:[%s247 + $0x70] sm:$0xff]
      %v273 = vld [vmem:[%s247 + $0x78] sm:$0xff]
      %274 = vset.pattern.permute.xlu0 0
      %275 = vperm.xlu0 %274, %v258
      %v276 = vpop.permute.xlu0 %275
      %277 = vset.pattern.permute.xlu0 0
      %278 = vperm.xlu0 %277, %v259
      %v279 = vpop.permute.xlu0 %278
      %280 = vset.pattern.permute.xlu0 0
      %281 = vperm.xlu0 %280, %v260
      %v282 = vpop.permute.xlu0 %281
      %283 = vset.pattern.permute.xlu0 0
      %284 = vperm.xlu0 %283, %v261
      %v285 = vpop.permute.xlu0 %284
      %286 = vset.pattern.permute.xlu0 0
      %287 = vperm.xlu0 %286, %v262
      %v288 = vpop.permute.xlu0 %287
      %289 = vset.pattern.permute.xlu0 0
      %290 = vperm.xlu0 %289, %v263
      %v291 = vpop.permute.xlu0 %290
      %292 = vset.pattern.permute.xlu0 0
      %293 = vperm.xlu0 %292, %v264
      %v294 = vpop.permute.xlu0 %293
      %295 = vset.pattern.permute.xlu0 0
      %296 = vperm.xlu0 %295, %v265
      %v297 = vpop.permute.xlu0 %296
      %298 = vset.pattern.permute.xlu0 0
      %299 = vperm.xlu0 %298, %v266
      %v300 = vpop.permute.xlu0 %299
      %301 = vset.pattern.permute.xlu0 0
      %302 = vperm.xlu0 %301, %v267
      %v303 = vpop.permute.xlu0 %302
      %304 = vset.pattern.permute.xlu0 0
      %305 = vperm.xlu0 %304, %v268
      %v306 = vpop.permute.xlu0 %305
      %307 = vset.pattern.permute.xlu0 0
      %308 = vperm.xlu0 %307, %v269
      %v309 = vpop.permute.xlu0 %308
      %310 = vset.pattern.permute.xlu0 0
      %311 = vperm.xlu0 %310, %v270
      %v312 = vpop.permute.xlu0 %311
      %313 = vset.pattern.permute.xlu0 0
      %314 = vperm.xlu0 %313, %v271
      %v315 = vpop.permute.xlu0 %314
      %316 = vset.pattern.permute.xlu0 0
      %317 = vperm.xlu0 %316, %v272
      %v318 = vpop.permute.xlu0 %317
      %319 = vset.pattern.permute.xlu0 0
      %320 = vperm.xlu0 %319, %v273
      %v321 = vpop.permute.xlu0 %320
      %vm322 = vcmp.eq.s32.totalorder %v257, %v276
      %vm323 = vcmp.eq.s32.totalorder %v257, %v279
      %vm324 = vcmp.eq.s32.totalorder %v257, %v282
      %vm325 = vcmp.eq.s32.totalorder %v257, %v285
      %vm326 = vcmp.eq.s32.totalorder %v257, %v288
      %vm327 = vcmp.eq.s32.totalorder %v257, %v291
      %vm328 = vcmp.eq.s32.totalorder %v257, %v294
      %vm329 = vcmp.eq.s32.totalorder %v257, %v297
      %vm330 = vcmp.eq.s32.totalorder %v257, %v300
      %vm331 = vcmp.eq.s32.totalorder %v257, %v303
      %vm332 = vcmp.eq.s32.totalorder %v257, %v306
      %vm333 = vcmp.eq.s32.totalorder %v257, %v309
      %vm334 = vcmp.eq.s32.totalorder %v257, %v312
      %vm335 = vcmp.eq.s32.totalorder %v257, %v315
      %vm336 = vcmp.eq.s32.totalorder %v257, %v318
      %vm337 = vcmp.eq.s32.totalorder %v257, %v321
      %v338 = vsel %vm322, 1, 0
      %v339 = vsel %vm323, 1, 0
      %v340 = vsel %vm324, 1, 0
      %v341 = vsel %vm325, 1, 0
      %v342 = vsel %vm326, 1, 0
      %v343 = vsel %vm327, 1, 0
      %v344 = vsel %vm328, 1, 0
      %v345 = vsel %vm329, 1, 0
      %v346 = vsel %vm330, 1, 0
      %v347 = vsel %vm331, 1, 0
      %v348 = vsel %vm332, 1, 0
      %v349 = vsel %vm333, 1, 0
      %v350 = vsel %vm334, 1, 0
      %v351 = vsel %vm335, 1, 0
      %v352 = vsel %vm336, 1, 0
      %v353 = vsel %vm337, 1, 0
      %v354 = vcvt.s32.f32 %v338
      %v355 = vcvt.s32.f32 %v339
      %v356 = vcvt.s32.f32 %v340
      %v357 = vcvt.s32.f32 %v341
      %v358 = vcvt.s32.f32 %v342
      %v359 = vcvt.s32.f32 %v343
      %v360 = vcvt.s32.f32 %v344
      %v361 = vcvt.s32.f32 %v345
      %v362 = vcvt.s32.f32 %v346
      %v363 = vcvt.s32.f32 %v347
      %v364 = vcvt.s32.f32 %v348
      %v365 = vcvt.s32.f32 %v349
      %v366 = vcvt.s32.f32 %v350
      %v367 = vcvt.s32.f32 %v351
      %v368 = vcvt.s32.f32 %v352
      %v369 = vcvt.s32.f32 %v353
      %v370 = vadd.f32 %v354, 0.0
      %v371 = vadd.f32 %v355, 0.0
      %v372 = vadd.f32 %v356, 0.0
      %v373 = vadd.f32 %v357, 0.0
      %v374 = vadd.f32 %v358, 0.0
      %v375 = vadd.f32 %v359, 0.0
      %v376 = vadd.f32 %v360, 0.0
      %v377 = vadd.f32 %v361, 0.0
      %v378 = vadd.f32 %v362, 0.0
      %v379 = vadd.f32 %v363, 0.0
      %v380 = vadd.f32 %v364, 0.0
      %v381 = vadd.f32 %v365, 0.0
      %v382 = vadd.f32 %v366, 0.0
      %v383 = vadd.f32 %v367, 0.0
      %v384 = vadd.f32 %v368, 0.0
      %v385 = vadd.f32 %v369, 0.0
      %386 = vset.pattern.permute.xlu0 1
      %387 = vperm.xlu0 %386, %v258
      %v388 = vpop.permute.xlu0 %387
      %389 = vset.pattern.permute.xlu0 1
      %390 = vperm.xlu0 %389, %v259
      %v391 = vpop.permute.xlu0 %390
      %392 = vset.pattern.permute.xlu0 1
      %393 = vperm.xlu0 %392, %v260
      %v394 = vpop.permute.xlu0 %393
      %395 = vset.pattern.permute.xlu0 1
      %396 = vperm.xlu0 %395, %v261
      %v397 = vpop.permute.xlu0 %396
      %398 = vset.pattern.permute.xlu0 1
      %399 = vperm.xlu0 %398, %v262
      %v400 = vpop.permute.xlu0 %399
      %401 = vset.pattern.permute.xlu0 1
      %402 = vperm.xlu0 %401, %v263
      %v403 = vpop.permute.xlu0 %402
      %404 = vset.pattern.permute.xlu0 1
      %405 = vperm.xlu0 %404, %v264
      %v406 = vpop.permute.xlu0 %405
      %407 = vset.pattern.permute.xlu0 1
      %408 = vperm.xlu0 %407, %v265
      %v409 = vpop.permute.xlu0 %408
      %410 = vset.pattern.permute.xlu0 1
      %411 = vperm.xlu0 %410, %v266
      %v412 = vpop.permute.xlu0 %411
      %413 = vset.pattern.permute.xlu0 1
      %414 = vperm.xlu0 %413, %v267
      %v415 = vpop.permute.xlu0 %414
      %416 = vset.pattern.permute.xlu0 1
      %417 = vperm.xlu0 %416, %v268
      %v418 = vpop.permute.xlu0 %417
      %419 = vset.pattern.permute.xlu0 1
      %420 = vperm.xlu0 %419, %v269
      %v421 = vpop.permute.xlu0 %420
      %422 = vset.pattern.permute.xlu0 1
      %423 = vperm.xlu0 %422, %v270
      %v424 = vpop.permute.xlu0 %423
      %425 = vset.pattern.permute.xlu0 1
      %426 = vperm.xlu0 %425, %v271
      %v427 = vpop.permute.xlu0 %426
      %428 = vset.pattern.permute.xlu0 1
      %429 = vperm.xlu0 %428, %v272
      %v430 = vpop.permute.xlu0 %429
      %431 = vset.pattern.permute.xlu0 1
      %432 = vperm.xlu0 %431, %v273
      %v433 = vpop.permute.xlu0 %432
      %vm434 = vcmp.eq.s32.totalorder %v257, %v388
      %vm435 = vcmp.eq.s32.totalorder %v257, %v391
      %vm436 = vcmp.eq.s32.totalorder %v257, %v394
      %vm437 = vcmp.eq.s32.totalorder %v257, %v397
      %vm438 = vcmp.eq.s32.totalorder %v257, %v400
      %vm439 = vcmp.eq.s32.totalorder %v257, %v403
      %vm440 = vcmp.eq.s32.totalorder %v257, %v406
      %vm441 = vcmp.eq.s32.totalorder %v257, %v409
      %vm442 = vcmp.eq.s32.totalorder %v257, %v412
      %vm443 = vcmp.eq.s32.totalorder %v257, %v415
      %vm444 = vcmp.eq.s32.totalorder %v257, %v418
      %vm445 = vcmp.eq.s32.totalorder %v257, %v421
      %vm446 = vcmp.eq.s32.totalorder %v257, %v424
      %vm447 = vcmp.eq.s32.totalorder %v257, %v427
      %vm448 = vcmp.eq.s32.totalorder %v257, %v430
      %vm449 = vcmp.eq.s32.totalorder %v257, %v433
      %v450 = vsel %vm434, 1, 0
      %v451 = vsel %vm435, 1, 0
      %v452 = vsel %vm436, 1, 0
      %v453 = vsel %vm437, 1, 0
      %v454 = vsel %vm438, 1, 0
      %v455 = vsel %vm439, 1, 0
      %v456 = vsel %vm440, 1, 0
      %v457 = vsel %vm441, 1, 0
      %v458 = vsel %vm442, 1, 0
      %v459 = vsel %vm443, 1, 0
      %v460 = vsel %vm444, 1, 0
      %v461 = vsel %vm445, 1, 0
      %v462 = vsel %vm446, 1, 0
      %v463 = vsel %vm447, 1, 0
      %v464 = vsel %vm448, 1, 0
      %v465 = vsel %vm449, 1, 0
      %v466 = vcvt.s32.f32 %v450
      %v467 = vcvt.s32.f32 %v451
      %v468 = vcvt.s32.f32 %v452
      %v469 = vcvt.s32.f32 %v453
      %v470 = vcvt.s32.f32 %v454
      %v471 = vcvt.s32.f32 %v455
      %v472 = vcvt.s32.f32 %v456
      %v473 = vcvt.s32.f32 %v457
      %v474 = vcvt.s32.f32 %v458
      %v475 = vcvt.s32.f32 %v459
      %v476 = vcvt.s32.f32 %v460
      %v477 = vcvt.s32.f32 %v461
      %v478 = vcvt.s32.f32 %v462
      %v479 = vcvt.s32.f32 %v463
      %v480 = vcvt.s32.f32 %v464
      %v481 = vcvt.s32.f32 %v465
      %v482 = vadd.f32 %v370, %v466
      %v483 = vadd.f32 %v371, %v467
      %v484 = vadd.f32 %v372, %v468
      %v485 = vadd.f32 %v373, %v469
      %v486 = vadd.f32 %v374, %v470
      %v487 = vadd.f32 %v375, %v471
      %v488 = vadd.f32 %v376, %v472
      %v489 = vadd.f32 %v377, %v473
      %v490 = vadd.f32 %v378, %v474
      %v491 = vadd.f32 %v379, %v475
      %v492 = vadd.f32 %v380, %v476
      %v493 = vadd.f32 %v381, %v477
      %v494 = vadd.f32 %v382, %v478
      %v495 = vadd.f32 %v383, %v479
      %v496 = vadd.f32 %v384, %v480
      %v497 = vadd.f32 %v385, %v481
      %498 = vset.pattern.permute.xlu0 2
      %499 = vperm.xlu0 %498, %v258
      %v500 = vpop.permute.xlu0 %499
      %501 = vset.pattern.permute.xlu0 2
      %502 = vperm.xlu0 %501, %v259
      %v503 = vpop.permute.xlu0 %502
      %504 = vset.pattern.permute.xlu0 2
      %505 = vperm.xlu0 %504, %v260
      %v506 = vpop.permute.xlu0 %505
      %507 = vset.pattern.permute.xlu0 2
      %508 = vperm.xlu0 %507, %v261
      %v509 = vpop.permute.xlu0 %508
      %510 = vset.pattern.permute.xlu0 2
      %511 = vperm.xlu0 %510, %v262
      %v512 = vpop.permute.xlu0 %511
      %513 = vset.pattern.permute.xlu0 2
      %514 = vperm.xlu0 %513, %v263
      %v515 = vpop.permute.xlu0 %514
      %516 = vset.pattern.permute.xlu0 2
      %517 = vperm.xlu0 %516, %v264
      %v518 = vpop.permute.xlu0 %517
      %519 = vset.pattern.permute.xlu0 2
      %520 = vperm.xlu0 %519, %v265
      %v521 = vpop.permute.xlu0 %520
      %522 = vset.pattern.permute.xlu0 2
      %523 = vperm.xlu0 %522, %v266
      %v524 = vpop.permute.xlu0 %523
      %525 = vset.pattern.permute.xlu0 2
      %526 = vperm.xlu0 %525, %v267
      %v527 = vpop.permute.xlu0 %526
      %528 = vset.pattern.permute.xlu0 2
      %529 = vperm.xlu0 %528, %v268
      %v530 = vpop.permute.xlu0 %529
      %531 = vset.pattern.permute.xlu0 2
      %532 = vperm.xlu0 %531, %v269
      %v533 = vpop.permute.xlu0 %532
      %534 = vset.pattern.permute.xlu0 2
      %535 = vperm.xlu0 %534, %v270
      %v536 = vpop.permute.xlu0 %535
      %537 = vset.pattern.permute.xlu0 2
      %538 = vperm.xlu0 %537, %v271
      %v539 = vpop.permute.xlu0 %538
      %540 = vset.pattern.permute.xlu0 2
      %541 = vperm.xlu0 %540, %v272
      %v542 = vpop.permute.xlu0 %541
      %543 = vset.pattern.permute.xlu0 2
      %544 = vperm.xlu0 %543, %v273
      %v545 = vpop.permute.xlu0 %544
      %vm546 = vcmp.eq.s32.totalorder %v257, %v500
      %vm547 = vcmp.eq.s32.totalorder %v257, %v503
      %vm548 = vcmp.eq.s32.totalorder %v257, %v506
      %vm549 = vcmp.eq.s32.totalorder %v257, %v509
      %vm550 = vcmp.eq.s32.totalorder %v257, %v512
      %vm551 = vcmp.eq.s32.totalorder %v257, %v515
      %vm552 = vcmp.eq.s32.totalorder %v257, %v518
      %vm553 = vcmp.eq.s32.totalorder %v257, %v521
      %vm554 = vcmp.eq.s32.totalorder %v257, %v524
      %vm555 = vcmp.eq.s32.totalorder %v257, %v527
      %vm556 = vcmp.eq.s32.totalorder %v257, %v530
      %vm557 = vcmp.eq.s32.totalorder %v257, %v533
      %vm558 = vcmp.eq.s32.totalorder %v257, %v536
      %vm559 = vcmp.eq.s32.totalorder %v257, %v539
      %vm560 = vcmp.eq.s32.totalorder %v257, %v542
      %vm561 = vcmp.eq.s32.totalorder %v257, %v545
      %v562 = vsel %vm546, 1, 0
      %v563 = vsel %vm547, 1, 0
      %v564 = vsel %vm548, 1, 0
      %v565 = vsel %vm549, 1, 0
      %v566 = vsel %vm550, 1, 0
      %v567 = vsel %vm551, 1, 0
      %v568 = vsel %vm552, 1, 0
      %v569 = vsel %vm553, 1, 0
      %v570 = vsel %vm554, 1, 0
      %v571 = vsel %vm555, 1, 0
      %v572 = vsel %vm556, 1, 0
      %v573 = vsel %vm557, 1, 0
      %v574 = vsel %vm558, 1, 0
      %v575 = vsel %vm559, 1, 0
      %v576 = vsel %vm560, 1, 0
      %v577 = vsel %vm561, 1, 0
      %v578 = vcvt.s32.f32 %v562
      %v579 = vcvt.s32.f32 %v563
      %v580 = vcvt.s32.f32 %v564
      %v581 = vcvt.s32.f32 %v565
      %v582 = vcvt.s32.f32 %v566
      %v583 = vcvt.s32.f32 %v567
      %v584 = vcvt.s32.f32 %v568
      %v585 = vcvt.s32.f32 %v569
      %v586 = vcvt.s32.f32 %v570
      %v587 = vcvt.s32.f32 %v571
      %v588 = vcvt.s32.f32 %v572
      %v589 = vcvt.s32.f32 %v573
      %v590 = vcvt.s32.f32 %v574
      %v591 = vcvt.s32.f32 %v575
      %v592 = vcvt.s32.f32 %v576
      %v593 = vcvt.s32.f32 %v577
      %v594 = vadd.f32 %v482, %v578
      %v595 = vadd.f32 %v483, %v579
      %v596 = vadd.f32 %v484, %v580
      %v597 = vadd.f32 %v485, %v581
      %v598 = vadd.f32 %v486, %v582
      %v599 = vadd.f32 %v487, %v583
      %v600 = vadd.f32 %v488, %v584
      %v601 = vadd.f32 %v489, %v585
      %v602 = vadd.f32 %v490, %v586
      %v603 = vadd.f32 %v491, %v587
      %v604 = vadd.f32 %v492, %v588
      %v605 = vadd.f32 %v493, %v589
      %v606 = vadd.f32 %v494, %v590
      %v607 = vadd.f32 %v495, %v591
      %v608 = vadd.f32 %v496, %v592
      %v609 = vadd.f32 %v497, %v593
      %610 = vset.pattern.permute.xlu0 3
      %611 = vperm.xlu0 %610, %v258
      %v612 = vpop.permute.xlu0 %611
      %613 = vset.pattern.permute.xlu0 3
      %614 = vperm.xlu0 %613, %v259
      %v615 = vpop.permute.xlu0 %614
      %616 = vset.pattern.permute.xlu0 3
      %617 = vperm.xlu0 %616, %v260
      %v618 = vpop.permute.xlu0 %617
      %619 = vset.pattern.permute.xlu0 3
      %620 = vperm.xlu0 %619, %v261
      %v621 = vpop.permute.xlu0 %620
      %622 = vset.pattern.permute.xlu0 3
      %623 = vperm.xlu0 %622, %v262
      %v624 = vpop.permute.xlu0 %623
      %625 = vset.pattern.permute.xlu0 3
      %626 = vperm.xlu0 %625, %v263
      %v627 = vpop.permute.xlu0 %626
      %628 = vset.pattern.permute.xlu0 3
      %629 = vperm.xlu0 %628, %v264
      %v630 = vpop.permute.xlu0 %629
      %631 = vset.pattern.permute.xlu0 3
      %632 = vperm.xlu0 %631, %v265
      %v633 = vpop.permute.xlu0 %632
      %634 = vset.pattern.permute.xlu0 3
      %635 = vperm.xlu0 %634, %v266
      %v636 = vpop.permute.xlu0 %635
      %637 = vset.pattern.permute.xlu0 3
      %638 = vperm.xlu0 %637, %v267
      %v639 = vpop.permute.xlu0 %638
      %640 = vset.pattern.permute.xlu0 3
      %641 = vperm.xlu0 %640, %v268
      %v642 = vpop.permute.xlu0 %641
      %643 = vset.pattern.permute.xlu0 3
      %644 = vperm.xlu0 %643, %v269
      %v645 = vpop.permute.xlu0 %644
      %646 = vset.pattern.permute.xlu0 3
      %647 = vperm.xlu0 %646, %v270
      %v648 = vpop.permute.xlu0 %647
      %649 = vset.pattern.permute.xlu0 3
      %650 = vperm.xlu0 %649, %v271
      %v651 = vpop.permute.xlu0 %650
      %652 = vset.pattern.permute.xlu0 3
      %653 = vperm.xlu0 %652, %v272
      %v654 = vpop.permute.xlu0 %653
      %655 = vset.pattern.permute.xlu0 3
      %656 = vperm.xlu0 %655, %v273
      %v657 = vpop.permute.xlu0 %656
      %vm658 = vcmp.eq.s32.totalorder %v257, %v612
      %vm659 = vcmp.eq.s32.totalorder %v257, %v615
      %vm660 = vcmp.eq.s32.totalorder %v257, %v618
      %vm661 = vcmp.eq.s32.totalorder %v257, %v621
      %vm662 = vcmp.eq.s32.totalorder %v257, %v624
      %vm663 = vcmp.eq.s32.totalorder %v257, %v627
      %vm664 = vcmp.eq.s32.totalorder %v257, %v630
      %vm665 = vcmp.eq.s32.totalorder %v257, %v633
      %vm666 = vcmp.eq.s32.totalorder %v257, %v636
      %vm667 = vcmp.eq.s32.totalorder %v257, %v639
      %vm668 = vcmp.eq.s32.totalorder %v257, %v642
      %vm669 = vcmp.eq.s32.totalorder %v257, %v645
      %vm670 = vcmp.eq.s32.totalorder %v257, %v648
      %vm671 = vcmp.eq.s32.totalorder %v257, %v651
      %vm672 = vcmp.eq.s32.totalorder %v257, %v654
      %vm673 = vcmp.eq.s32.totalorder %v257, %v657
      %v674 = vsel %vm658, 1, 0
      %v675 = vsel %vm659, 1, 0
      %v676 = vsel %vm660, 1, 0
      %v677 = vsel %vm661, 1, 0
      %v678 = vsel %vm662, 1, 0
      %v679 = vsel %vm663, 1, 0
      %v680 = vsel %vm664, 1, 0
      %v681 = vsel %vm665, 1, 0
      %v682 = vsel %vm666, 1, 0
      %v683 = vsel %vm667, 1, 0
      %v684 = vsel %vm668, 1, 0
      %v685 = vsel %vm669, 1, 0
      %v686 = vsel %vm670, 1, 0
      %v687 = vsel %vm671, 1, 0
      %v688 = vsel %vm672, 1, 0
      %v689 = vsel %vm673, 1, 0
      %v690 = vcvt.s32.f32 %v674
      %v691 = vcvt.s32.f32 %v675
      %v692 = vcvt.s32.f32 %v676
      %v693 = vcvt.s32.f32 %v677
      %v694 = vcvt.s32.f32 %v678
      %v695 = vcvt.s32.f32 %v679
      %v696 = vcvt.s32.f32 %v680
      %v697 = vcvt.s32.f32 %v681
      %v698 = vcvt.s32.f32 %v682
      %v699 = vcvt.s32.f32 %v683
      %v700 = vcvt.s32.f32 %v684
      %v701 = vcvt.s32.f32 %v685
      %v702 = vcvt.s32.f32 %v686
      %v703 = vcvt.s32.f32 %v687
      %v704 = vcvt.s32.f32 %v688
      %v705 = vcvt.s32.f32 %v689
      %v706 = vadd.f32 %v594, %v690
      %v707 = vadd.f32 %v595, %v691
      %v708 = vadd.f32 %v596, %v692
      %v709 = vadd.f32 %v597, %v693
      %v710 = vadd.f32 %v598, %v694
      %v711 = vadd.f32 %v599, %v695
      %v712 = vadd.f32 %v600, %v696
      %v713 = vadd.f32 %v601, %v697
      %v714 = vadd.f32 %v602, %v698
      %v715 = vadd.f32 %v603, %v699
      %v716 = vadd.f32 %v604, %v700
      %v717 = vadd.f32 %v605, %v701
      %v718 = vadd.f32 %v606, %v702
      %v719 = vadd.f32 %v607, %v703
      %v720 = vadd.f32 %v608, %v704
      %v721 = vadd.f32 %v609, %v705
      %722 = vset.pattern.permute.xlu0 4
      %723 = vperm.xlu0 %722, %v258
      %v724 = vpop.permute.xlu0 %723
      %725 = vset.pattern.permute.xlu0 4
      %726 = vperm.xlu0 %725, %v259
      %v727 = vpop.permute.xlu0 %726
      %728 = vset.pattern.permute.xlu0 4
      %729 = vperm.xlu0 %728, %v260
      %v730 = vpop.permute.xlu0 %729
      %731 = vset.pattern.permute.xlu0 4
      %732 = vperm.xlu0 %731, %v261
      %v733 = vpop.permute.xlu0 %732
      %734 = vset.pattern.permute.xlu0 4
      %735 = vperm.xlu0 %734, %v262
      %v736 = vpop.permute.xlu0 %735
      %737 = vset.pattern.permute.xlu0 4
      %738 = vperm.xlu0 %737, %v263
      %v739 = vpop.permute.xlu0 %738
      %740 = vset.pattern.permute.xlu0 4
      %741 = vperm.xlu0 %740, %v264
      %v742 = vpop.permute.xlu0 %741
      %743 = vset.pattern.permute.xlu0 4
      %744 = vperm.xlu0 %743, %v265
      %v745 = vpop.permute.xlu0 %744
      %746 = vset.pattern.permute.xlu0 4
      %747 = vperm.xlu0 %746, %v266
      %v748 = vpop.permute.xlu0 %747
      %749 = vset.pattern.permute.xlu0 4
      %750 = vperm.xlu0 %749, %v267
      %v751 = vpop.permute.xlu0 %750
      %752 = vset.pattern.permute.xlu0 4
      %753 = vperm.xlu0 %752, %v268
      %v754 = vpop.permute.xlu0 %753
      %755 = vset.pattern.permute.xlu0 4
      %756 = vperm.xlu0 %755, %v269
      %v757 = vpop.permute.xlu0 %756
      %758 = vset.pattern.permute.xlu0 4
      %759 = vperm.xlu0 %758, %v270
      %v760 = vpop.permute.xlu0 %759
      %761 = vset.pattern.permute.xlu0 4
      %762 = vperm.xlu0 %761, %v271
      %v763 = vpop.permute.xlu0 %762
      %764 = vset.pattern.permute.xlu0 4
      %765 = vperm.xlu0 %764, %v272
      %v766 = vpop.permute.xlu0 %765
      %767 = vset.pattern.permute.xlu0 4
      %768 = vperm.xlu0 %767, %v273
      %v769 = vpop.permute.xlu0 %768
      %vm770 = vcmp.eq.s32.totalorder %v257, %v724
      %vm771 = vcmp.eq.s32.totalorder %v257, %v727
      %vm772 = vcmp.eq.s32.totalorder %v257, %v730
      %vm773 = vcmp.eq.s32.totalorder %v257, %v733
      %vm774 = vcmp.eq.s32.totalorder %v257, %v736
      %vm775 = vcmp.eq.s32.totalorder %v257, %v739
      %vm776 = vcmp.eq.s32.totalorder %v257, %v742
      %vm777 = vcmp.eq.s32.totalorder %v257, %v745
      %vm778 = vcmp.eq.s32.totalorder %v257, %v748
      %vm779 = vcmp.eq.s32.totalorder %v257, %v751
      %vm780 = vcmp.eq.s32.totalorder %v257, %v754
      %vm781 = vcmp.eq.s32.totalorder %v257, %v757
      %vm782 = vcmp.eq.s32.totalorder %v257, %v760
      %vm783 = vcmp.eq.s32.totalorder %v257, %v763
      %vm784 = vcmp.eq.s32.totalorder %v257, %v766
      %vm785 = vcmp.eq.s32.totalorder %v257, %v769
      %v786 = vsel %vm770, 1, 0
      %v787 = vsel %vm771, 1, 0
      %v788 = vsel %vm772, 1, 0
      %v789 = vsel %vm773, 1, 0
      %v790 = vsel %vm774, 1, 0
      %v791 = vsel %vm775, 1, 0
      %v792 = vsel %vm776, 1, 0
      %v793 = vsel %vm777, 1, 0
      %v794 = vsel %vm778, 1, 0
      %v795 = vsel %vm779, 1, 0
      %v796 = vsel %vm780, 1, 0
      %v797 = vsel %vm781, 1, 0
      %v798 = vsel %vm782, 1, 0
      %v799 = vsel %vm783, 1, 0
      %v800 = vsel %vm784, 1, 0
      %v801 = vsel %vm785, 1, 0
      %v802 = vcvt.s32.f32 %v786
      %v803 = vcvt.s32.f32 %v787
      %v804 = vcvt.s32.f32 %v788
      %v805 = vcvt.s32.f32 %v789
      %v806 = vcvt.s32.f32 %v790
      %v807 = vcvt.s32.f32 %v791
      %v808 = vcvt.s32.f32 %v792
      %v809 = vcvt.s32.f32 %v793
      %v810 = vcvt.s32.f32 %v794
      %v811 = vcvt.s32.f32 %v795
      %v812 = vcvt.s32.f32 %v796
      %v813 = vcvt.s32.f32 %v797
      %v814 = vcvt.s32.f32 %v798
      %v815 = vcvt.s32.f32 %v799
      %v816 = vcvt.s32.f32 %v800
      %v817 = vcvt.s32.f32 %v801
      %v818 = vadd.f32 %v706, %v802
      %v819 = vadd.f32 %v707, %v803
      %v820 = vadd.f32 %v708, %v804
      %v821 = vadd.f32 %v709, %v805
      %v822 = vadd.f32 %v710, %v806
      %v823 = vadd.f32 %v711, %v807
      %v824 = vadd.f32 %v712, %v808
      %v825 = vadd.f32 %v713, %v809
      %v826 = vadd.f32 %v714, %v810
      %v827 = vadd.f32 %v715, %v811
      %v828 = vadd.f32 %v716, %v812
      %v829 = vadd.f32 %v717, %v813
      %v830 = vadd.f32 %v718, %v814
      %v831 = vadd.f32 %v719, %v815
      %v832 = vadd.f32 %v720, %v816
      %v833 = vadd.f32 %v721, %v817
      %834 = vset.pattern.permute.xlu0 5
      %835 = vperm.xlu0 %834, %v258
      %v836 = vpop.permute.xlu0 %835
      %837 = vset.pattern.permute.xlu0 5
      %838 = vperm.xlu0 %837, %v259
      %v839 = vpop.permute.xlu0 %838
      %840 = vset.pattern.permute.xlu0 5
      %841 = vperm.xlu0 %840, %v260
      %v842 = vpop.permute.xlu0 %841
      %843 = vset.pattern.permute.xlu0 5
      %844 = vperm.xlu0 %843, %v261
      %v845 = vpop.permute.xlu0 %844
      %846 = vset.pattern.permute.xlu0 5
      %847 = vperm.xlu0 %846, %v262
      %v848 = vpop.permute.xlu0 %847
      %849 = vset.pattern.permute.xlu0 5
      %850 = vperm.xlu0 %849, %v263
      %v851 = vpop.permute.xlu0 %850
      %852 = vset.pattern.permute.xlu0 5
      %853 = vperm.xlu0 %852, %v264
      %v854 = vpop.permute.xlu0 %853
      %855 = vset.pattern.permute.xlu0 5
      %856 = vperm.xlu0 %855, %v265
      %v857 = vpop.permute.xlu0 %856
      %858 = vset.pattern.permute.xlu0 5
      %859 = vperm.xlu0 %858, %v266
      %v860 = vpop.permute.xlu0 %859
      %861 = vset.pattern.permute.xlu0 5
      %862 = vperm.xlu0 %861, %v267
      %v863 = vpop.permute.xlu0 %862
      %864 = vset.pattern.permute.xlu0 5
      %865 = vperm.xlu0 %864, %v268
      %v866 = vpop.permute.xlu0 %865
      %867 = vset.pattern.permute.xlu0 5
      %868 = vperm.xlu0 %867, %v269
      %v869 = vpop.permute.xlu0 %868
      %870 = vset.pattern.permute.xlu0 5
      %871 = vperm.xlu0 %870, %v270
      %v872 = vpop.permute.xlu0 %871
      %873 = vset.pattern.permute.xlu0 5
      %874 = vperm.xlu0 %873, %v271
      %v875 = vpop.permute.xlu0 %874
      %876 = vset.pattern.permute.xlu0 5
      %877 = vperm.xlu0 %876, %v272
      %v878 = vpop.permute.xlu0 %877
      %879 = vset.pattern.permute.xlu0 5
      %880 = vperm.xlu0 %879, %v273
      %v881 = vpop.permute.xlu0 %880
      %vm882 = vcmp.eq.s32.totalorder %v257, %v836
      %vm883 = vcmp.eq.s32.totalorder %v257, %v839
      %vm884 = vcmp.eq.s32.totalorder %v257, %v842
      %vm885 = vcmp.eq.s32.totalorder %v257, %v845
      %vm886 = vcmp.eq.s32.totalorder %v257, %v848
      %vm887 = vcmp.eq.s32.totalorder %v257, %v851
      %vm888 = vcmp.eq.s32.totalorder %v257, %v854
      %vm889 = vcmp.eq.s32.totalorder %v257, %v857
      %vm890 = vcmp.eq.s32.totalorder %v257, %v860
      %vm891 = vcmp.eq.s32.totalorder %v257, %v863
      %vm892 = vcmp.eq.s32.totalorder %v257, %v866
      %vm893 = vcmp.eq.s32.totalorder %v257, %v869
      %vm894 = vcmp.eq.s32.totalorder %v257, %v872
      %vm895 = vcmp.eq.s32.totalorder %v257, %v875
      %vm896 = vcmp.eq.s32.totalorder %v257, %v878
      %vm897 = vcmp.eq.s32.totalorder %v257, %v881
      %v898 = vsel %vm882, 1, 0
      %v899 = vsel %vm883, 1, 0
      %v900 = vsel %vm884, 1, 0
      %v901 = vsel %vm885, 1, 0
      %v902 = vsel %vm886, 1, 0
      %v903 = vsel %vm887, 1, 0
      %v904 = vsel %vm888, 1, 0
      %v905 = vsel %vm889, 1, 0
      %v906 = vsel %vm890, 1, 0
      %v907 = vsel %vm891, 1, 0
      %v908 = vsel %vm892, 1, 0
      %v909 = vsel %vm893, 1, 0
      %v910 = vsel %vm894, 1, 0
      %v911 = vsel %vm895, 1, 0
      %v912 = vsel %vm896, 1, 0
      %v913 = vsel %vm897, 1, 0
      %v914 = vcvt.s32.f32 %v898
      %v915 = vcvt.s32.f32 %v899
      %v916 = vcvt.s32.f32 %v900
      %v917 = vcvt.s32.f32 %v901
      %v918 = vcvt.s32.f32 %v902
      %v919 = vcvt.s32.f32 %v903
      %v920 = vcvt.s32.f32 %v904
      %v921 = vcvt.s32.f32 %v905
      %v922 = vcvt.s32.f32 %v906
      %v923 = vcvt.s32.f32 %v907
      %v924 = vcvt.s32.f32 %v908
      %v925 = vcvt.s32.f32 %v909
      %v926 = vcvt.s32.f32 %v910
      %v927 = vcvt.s32.f32 %v911
      %v928 = vcvt.s32.f32 %v912
      %v929 = vcvt.s32.f32 %v913
      %v930 = vadd.f32 %v818, %v914
      %v931 = vadd.f32 %v819, %v915
      %v932 = vadd.f32 %v820, %v916
      %v933 = vadd.f32 %v821, %v917
      %v934 = vadd.f32 %v822, %v918
      %v935 = vadd.f32 %v823, %v919
      %v936 = vadd.f32 %v824, %v920
      %v937 = vadd.f32 %v825, %v921
      %v938 = vadd.f32 %v826, %v922
      %v939 = vadd.f32 %v827, %v923
      %v940 = vadd.f32 %v828, %v924
      %v941 = vadd.f32 %v829, %v925
      %v942 = vadd.f32 %v830, %v926
      %v943 = vadd.f32 %v831, %v927
      %v944 = vadd.f32 %v832, %v928
      %v945 = vadd.f32 %v833, %v929
      %946 = vset.pattern.permute.xlu0 6
      %947 = vperm.xlu0 %946, %v258
      %v948 = vpop.permute.xlu0 %947
      %949 = vset.pattern.permute.xlu0 6
      %950 = vperm.xlu0 %949, %v259
      %v951 = vpop.permute.xlu0 %950
      %952 = vset.pattern.permute.xlu0 6
      %953 = vperm.xlu0 %952, %v260
      %v954 = vpop.permute.xlu0 %953
      %955 = vset.pattern.permute.xlu0 6
      %956 = vperm.xlu0 %955, %v261
      %v957 = vpop.permute.xlu0 %956
      %958 = vset.pattern.permute.xlu0 6
      %959 = vperm.xlu0 %958, %v262
      %v960 = vpop.permute.xlu0 %959
      %961 = vset.pattern.permute.xlu0 6
      %962 = vperm.xlu0 %961, %v263
      %v963 = vpop.permute.xlu0 %962
      %964 = vset.pattern.permute.xlu0 6
      %965 = vperm.xlu0 %964, %v264
      %v966 = vpop.permute.xlu0 %965
      %967 = vset.pattern.permute.xlu0 6
      %968 = vperm.xlu0 %967, %v265
      %v969 = vpop.permute.xlu0 %968
      %970 = vset.pattern.permute.xlu0 6
      %971 = vperm.xlu0 %970, %v266
      %v972 = vpop.permute.xlu0 %971
      %973 = vset.pattern.permute.xlu0 6
      %974 = vperm.xlu0 %973, %v267
      %v975 = vpop.permute.xlu0 %974
      %976 = vset.pattern.permute.xlu0 6
      %977 = vperm.xlu0 %976, %v268
      %v978 = vpop.permute.xlu0 %977
      %979 = vset.pattern.permute.xlu0 6
      %980 = vperm.xlu0 %979, %v269
      %v981 = vpop.permute.xlu0 %980
      %982 = vset.pattern.permute.xlu0 6
      %983 = vperm.xlu0 %982, %v270
      %v984 = vpop.permute.xlu0 %983
      %985 = vset.pattern.permute.xlu0 6
      %986 = vperm.xlu0 %985, %v271
      %v987 = vpop.permute.xlu0 %986
      %988 = vset.pattern.permute.xlu0 6
      %989 = vperm.xlu0 %988, %v272
      %v990 = vpop.permute.xlu0 %989
      %991 = vset.pattern.permute.xlu0 6
      %992 = vperm.xlu0 %991, %v273
      %v993 = vpop.permute.xlu0 %992
      %vm994 = vcmp.eq.s32.totalorder %v257, %v948
      %vm995 = vcmp.eq.s32.totalorder %v257, %v951
      %vm996 = vcmp.eq.s32.totalorder %v257, %v954
      %vm997 = vcmp.eq.s32.totalorder %v257, %v957
      %vm998 = vcmp.eq.s32.totalorder %v257, %v960
      %vm999 = vcmp.eq.s32.totalorder %v257, %v963
      %vm1000 = vcmp.eq.s32.totalorder %v257, %v966
      %vm1001 = vcmp.eq.s32.totalorder %v257, %v969
      %vm1002 = vcmp.eq.s32.totalorder %v257, %v972
      %vm1003 = vcmp.eq.s32.totalorder %v257, %v975
      %vm1004 = vcmp.eq.s32.totalorder %v257, %v978
      %vm1005 = vcmp.eq.s32.totalorder %v257, %v981
      %vm1006 = vcmp.eq.s32.totalorder %v257, %v984
      %vm1007 = vcmp.eq.s32.totalorder %v257, %v987
      %vm1008 = vcmp.eq.s32.totalorder %v257, %v990
      %vm1009 = vcmp.eq.s32.totalorder %v257, %v993
      %v1010 = vsel %vm994, 1, 0
      %v1011 = vsel %vm995, 1, 0
      %v1012 = vsel %vm996, 1, 0
      %v1013 = vsel %vm997, 1, 0
      %v1014 = vsel %vm998, 1, 0
      %v1015 = vsel %vm999, 1, 0
      %v1016 = vsel %vm1000, 1, 0
      %v1017 = vsel %vm1001, 1, 0
      %v1018 = vsel %vm1002, 1, 0
      %v1019 = vsel %vm1003, 1, 0
      %v1020 = vsel %vm1004, 1, 0
      %v1021 = vsel %vm1005, 1, 0
      %v1022 = vsel %vm1006, 1, 0
      %v1023 = vsel %vm1007, 1, 0
      %v1024 = vsel %vm1008, 1, 0
      %v1025 = vsel %vm1009, 1, 0
      %v1026 = vcvt.s32.f32 %v1010
      %v1027 = vcvt.s32.f32 %v1011
      %v1028 = vcvt.s32.f32 %v1012
      %v1029 = vcvt.s32.f32 %v1013
      %v1030 = vcvt.s32.f32 %v1014
      %v1031 = vcvt.s32.f32 %v1015
      %v1032 = vcvt.s32.f32 %v1016
      %v1033 = vcvt.s32.f32 %v1017
      %v1034 = vcvt.s32.f32 %v1018
      %v1035 = vcvt.s32.f32 %v1019
      %v1036 = vcvt.s32.f32 %v1020
      %v1037 = vcvt.s32.f32 %v1021
      %v1038 = vcvt.s32.f32 %v1022
      %v1039 = vcvt.s32.f32 %v1023
      %v1040 = vcvt.s32.f32 %v1024
      %v1041 = vcvt.s32.f32 %v1025
      %v1042 = vadd.f32 %v930, %v1026
      %v1043 = vadd.f32 %v931, %v1027
      %v1044 = vadd.f32 %v932, %v1028
      %v1045 = vadd.f32 %v933, %v1029
      %v1046 = vadd.f32 %v934, %v1030
      %v1047 = vadd.f32 %v935, %v1031
      %v1048 = vadd.f32 %v936, %v1032
      %v1049 = vadd.f32 %v937, %v1033
      %v1050 = vadd.f32 %v938, %v1034
      %v1051 = vadd.f32 %v939, %v1035
      %v1052 = vadd.f32 %v940, %v1036
      %v1053 = vadd.f32 %v941, %v1037
      %v1054 = vadd.f32 %v942, %v1038
      %v1055 = vadd.f32 %v943, %v1039
      %v1056 = vadd.f32 %v944, %v1040
      %v1057 = vadd.f32 %v945, %v1041
      %1058 = vset.pattern.permute.xlu0 7
      %1059 = vperm.xlu0 %1058, %v258
      %v1060 = vpop.permute.xlu0 %1059
      %1061 = vset.pattern.permute.xlu0 7
      %1062 = vperm.xlu0 %1061, %v259
      %v1063 = vpop.permute.xlu0 %1062
      %1064 = vset.pattern.permute.xlu0 7
      %1065 = vperm.xlu0 %1064, %v260
      %v1066 = vpop.permute.xlu0 %1065
      %1067 = vset.pattern.permute.xlu0 7
      %1068 = vperm.xlu0 %1067, %v261
      %v1069 = vpop.permute.xlu0 %1068
      %1070 = vset.pattern.permute.xlu0 7
      %1071 = vperm.xlu0 %1070, %v262
      %v1072 = vpop.permute.xlu0 %1071
      %1073 = vset.pattern.permute.xlu0 7
      %1074 = vperm.xlu0 %1073, %v263
      %v1075 = vpop.permute.xlu0 %1074
      %1076 = vset.pattern.permute.xlu0 7
      %1077 = vperm.xlu0 %1076, %v264
      %v1078 = vpop.permute.xlu0 %1077
      %1079 = vset.pattern.permute.xlu0 7
      %1080 = vperm.xlu0 %1079, %v265
      %v1081 = vpop.permute.xlu0 %1080
      %1082 = vset.pattern.permute.xlu0 7
      %1083 = vperm.xlu0 %1082, %v266
      %v1084 = vpop.permute.xlu0 %1083
      %1085 = vset.pattern.permute.xlu0 7
      %1086 = vperm.xlu0 %1085, %v267
      %v1087 = vpop.permute.xlu0 %1086
      %1088 = vset.pattern.permute.xlu0 7
      %1089 = vperm.xlu0 %1088, %v268
      %v1090 = vpop.permute.xlu0 %1089
      %1091 = vset.pattern.permute.xlu0 7
      %1092 = vperm.xlu0 %1091, %v269
      %v1093 = vpop.permute.xlu0 %1092
      %1094 = vset.pattern.permute.xlu0 7
      %1095 = vperm.xlu0 %1094, %v270
      %v1096 = vpop.permute.xlu0 %1095
      %1097 = vset.pattern.permute.xlu0 7
      %1098 = vperm.xlu0 %1097, %v271
      %v1099 = vpop.permute.xlu0 %1098
      %1100 = vset.pattern.permute.xlu0 7
      %1101 = vperm.xlu0 %1100, %v272
      %v1102 = vpop.permute.xlu0 %1101
      %1103 = vset.pattern.permute.xlu0 7
      %1104 = vperm.xlu0 %1103, %v273
      %v1105 = vpop.permute.xlu0 %1104
      %vm1106 = vcmp.eq.s32.totalorder %v257, %v1060
      %vm1107 = vcmp.eq.s32.totalorder %v257, %v1063
      %vm1108 = vcmp.eq.s32.totalorder %v257, %v1066
      %vm1109 = vcmp.eq.s32.totalorder %v257, %v1069
      %vm1110 = vcmp.eq.s32.totalorder %v257, %v1072
      %vm1111 = vcmp.eq.s32.totalorder %v257, %v1075
      %vm1112 = vcmp.eq.s32.totalorder %v257, %v1078
      %vm1113 = vcmp.eq.s32.totalorder %v257, %v1081
      %vm1114 = vcmp.eq.s32.totalorder %v257, %v1084
      %vm1115 = vcmp.eq.s32.totalorder %v257, %v1087
      %vm1116 = vcmp.eq.s32.totalorder %v257, %v1090
      %vm1117 = vcmp.eq.s32.totalorder %v257, %v1093
      %vm1118 = vcmp.eq.s32.totalorder %v257, %v1096
      %vm1119 = vcmp.eq.s32.totalorder %v257, %v1099
      %vm1120 = vcmp.eq.s32.totalorder %v257, %v1102
      %vm1121 = vcmp.eq.s32.totalorder %v257, %v1105
      %v1122 = vsel %vm1106, 1, 0
      %v1123 = vsel %vm1107, 1, 0
      %v1124 = vsel %vm1108, 1, 0
      %v1125 = vsel %vm1109, 1, 0
      %v1126 = vsel %vm1110, 1, 0
      %v1127 = vsel %vm1111, 1, 0
      %v1128 = vsel %vm1112, 1, 0
      %v1129 = vsel %vm1113, 1, 0
      %v1130 = vsel %vm1114, 1, 0
      %v1131 = vsel %vm1115, 1, 0
      %v1132 = vsel %vm1116, 1, 0
      %v1133 = vsel %vm1117, 1, 0
      %v1134 = vsel %vm1118, 1, 0
      %v1135 = vsel %vm1119, 1, 0
      %v1136 = vsel %vm1120, 1, 0
      %v1137 = vsel %vm1121, 1, 0
      %v1138 = vcvt.s32.f32 %v1122
      %v1139 = vcvt.s32.f32 %v1123
      %v1140 = vcvt.s32.f32 %v1124
      %v1141 = vcvt.s32.f32 %v1125
      %v1142 = vcvt.s32.f32 %v1126
      %v1143 = vcvt.s32.f32 %v1127
      %v1144 = vcvt.s32.f32 %v1128
      %v1145 = vcvt.s32.f32 %v1129
      %v1146 = vcvt.s32.f32 %v1130
      %v1147 = vcvt.s32.f32 %v1131
      %v1148 = vcvt.s32.f32 %v1132
      %v1149 = vcvt.s32.f32 %v1133
      %v1150 = vcvt.s32.f32 %v1134
      %v1151 = vcvt.s32.f32 %v1135
      %v1152 = vcvt.s32.f32 %v1136
      %v1153 = vcvt.s32.f32 %v1137
      %v1154 = vadd.f32 %v1042, %v1138
      %v1155 = vadd.f32 %v1043, %v1139
      %v1156 = vadd.f32 %v1044, %v1140
      %v1157 = vadd.f32 %v1045, %v1141
      %v1158 = vadd.f32 %v1046, %v1142
      %v1159 = vadd.f32 %v1047, %v1143
      %v1160 = vadd.f32 %v1048, %v1144
      %v1161 = vadd.f32 %v1049, %v1145
      %v1162 = vadd.f32 %v1050, %v1146
      %v1163 = vadd.f32 %v1051, %v1147
      %v1164 = vadd.f32 %v1052, %v1148
      %v1165 = vadd.f32 %v1053, %v1149
      %v1166 = vadd.f32 %v1054, %v1150
      %v1167 = vadd.f32 %v1055, %v1151
      %v1168 = vadd.f32 %v1056, %v1152
      %v1169 = vadd.f32 %v1057, %v1153
      %v1170 = vpack.c.bf16 %v1155, %v1154
      %v1171 = vpack.c.bf16 %v1157, %v1156
      %v1172 = vpack.c.bf16 %v1159, %v1158
      %v1173 = vpack.c.bf16 %v1161, %v1160
      %v1174 = vpack.c.bf16 %v1163, %v1162
      %v1175 = vpack.c.bf16 %v1165, %v1164
      %v1176 = vpack.c.bf16 %v1167, %v1166
      %v1177 = vpack.c.bf16 %v1169, %v1168
      %v1178 = vld [vmem:[%s1] sm:$0xf]
      %v1179 = vld [vmem:[%s1 + $0x4] sm:$0xf]
      %v1180 = vld [vmem:[%s1 + $0x8] sm:$0xf]
      %v1181 = vld [vmem:[%s1 + $0xc] sm:$0xf]
      %v1182 = vld [vmem:[%s1 + $0x10] sm:$0xf]
      %v1183 = vld [vmem:[%s1 + $0x14] sm:$0xf]
      %v1184 = vld [vmem:[%s1 + $0x18] sm:$0xf]
      %v1185 = vld [vmem:[%s1 + $0x1c] sm:$0xf]
      %v1186 = vld [vmem:[%s1 + $0x20] sm:$0xf]
      %v1187 = vld [vmem:[%s1 + $0x24] sm:$0xf]
      %v1188 = vld [vmem:[%s1 + $0x28] sm:$0xf]
      %v1189 = vld [vmem:[%s1 + $0x2c] sm:$0xf]
      %v1190 = vld [vmem:[%s1 + $0x30] sm:$0xf]
      %v1191 = vld [vmem:[%s1 + $0x34] sm:$0xf]
      %v1192 = vld [vmem:[%s1 + $0x38] sm:$0xf]
      %v1193 = vld [vmem:[%s1 + $0x3c] sm:$0xf]
      %v1210 = vunpack.c.l.b16 %v1178
      %v1211 = vunpack.c.l.b16 %v1179
      %v1212 = vunpack.c.l.b16 %v1180
      %v1213 = vunpack.c.l.b16 %v1181
      %v1214 = vunpack.c.l.b16 %v1182
      %v1215 = vunpack.c.l.b16 %v1183
      %v1216 = vunpack.c.l.b16 %v1184
      %v1217 = vunpack.c.l.b16 %v1185
      %v1218 = vunpack.c.l.b16 %v1186
      %v1219 = vunpack.c.l.b16 %v1187
      %v1220 = vunpack.c.l.b16 %v1188
      %v1221 = vunpack.c.l.b16 %v1189
      %v1222 = vunpack.c.l.b16 %v1190
      %v1223 = vunpack.c.l.b16 %v1191
      %v1224 = vunpack.c.l.b16 %v1192
      %v1225 = vunpack.c.l.b16 %v1193
      %v1226 = vpack.c.b16 %v1211, %v1210
      %v1227 = vpack.c.b16 %v1213, %v1212
      %v1228 = vpack.c.b16 %v1215, %v1214
      %v1229 = vpack.c.b16 %v1217, %v1216
      %v1230 = vpack.c.b16 %v1219, %v1218
      %v1231 = vpack.c.b16 %v1221, %v1220
      %v1232 = vpack.c.b16 %v1223, %v1222
      %v1233 = vpack.c.b16 %v1225, %v1224
      %1242 = vmatprep.subr.bf16.mxu0 0
      %1243 = vmatpush1.bf16.msra.mxu0 %v1226
      %1244 = vmatprep.subr.bf16.mxu0 0
      %1245 = vmatpush1.bf16.msra.mxu0 %v1227
      %1246 = vmatprep.subr.bf16.mxu0 0
      %1247 = vmatpush1.bf16.msra.mxu0 %v1228
      %1248 = vmatprep.subr.bf16.mxu0 0
      %1249 = vmatpush1.bf16.msra.mxu0 %v1229
      %1250 = vmatprep.subr.bf16.mxu0 0
      %1251 = vmatpush1.bf16.msra.mxu0 %v1230
      %1252 = vmatprep.subr.bf16.mxu0 0
      %1253 = vmatpush1.bf16.msra.mxu0 %v1231
      %1254 = vmatprep.subr.bf16.mxu0 0
      %1255 = vmatpush1.bf16.msra.mxu0 %v1232
      %1256 = vmatprep.subr.bf16.mxu0 0
      %1257 = vmatpush1.bf16.msra.mxu0 %v1233
      %1258 = vmatprep.subr.bf16.mxu0 0
      %1259 = vmatpush1.bf16.msra.mxu0 0
      %1260 = vmatprep.subr.bf16.mxu0 0
      %1261 = vmatpush1.bf16.msra.mxu0 0
      %1262 = vmatprep.subr.bf16.mxu0 0
      %1263 = vmatpush1.bf16.msra.mxu0 0
      %1264 = vmatprep.subr.bf16.mxu0 0
      %1265 = vmatpush1.bf16.msra.mxu0 0
      %1266 = vmatprep.subr.bf16.mxu0 0
      %1267 = vmatpush1.bf16.msra.mxu0 0
      %1268 = vmatprep.subr.bf16.mxu0 0
      %1269 = vmatpush1.bf16.msra.mxu0 0
      %1270 = vmatprep.subr.bf16.mxu0 0
      %1271 = vmatpush1.bf16.msra.mxu0 0
      %1272 = vmatprep.subr.bf16.mxu0 0
      %1273 = vmatpush1.bf16.msra.mxu0 0
      %1274 = vmatprep.mubr.bf16.mxu0 0
      %1275 = vmatmul.mubr.bf16.gmra.mrb[0].mxu0 %v1170
      %v1276 = vpop.f32.mrb[0].mxu0
      %v1277 = vadd.f32 0.0, %v1276
      %v1278 = vpop.f32.mrb[0].mxu0
      %v1279 = vpop.f32.mrb[0].mxu0
      %v1280 = vadd.f32 0.0, %v1279
      %v1281 = vpop.f32.mrb[0].mxu0
      %1282 = vmatprep.mubr.bf16.mxu0 0
      %1283 = vmatmul.mubr.bf16.gmra.mrb[0].mxu0 %v1171
      %v1284 = vpop.f32.mrb[0].mxu0
      %v1285 = vadd.f32 0.0, %v1284
      %v1286 = vpop.f32.mrb[0].mxu0
      %v1287 = vpop.f32.mrb[0].mxu0
      %v1288 = vadd.f32 0.0, %v1287
      %v1289 = vpop.f32.mrb[0].mxu0
      %1290 = vmatprep.mubr.bf16.mxu0 0
      %1291 = vmatmul.mubr.bf16.gmra.mrb[0].mxu0 %v1172
      %v1292 = vpop.f32.mrb[0].mxu0
      %v1293 = vadd.f32 0.0, %v1292
      %v1294 = vpop.f32.mrb[0].mxu0
      %v1295 = vpop.f32.mrb[0].mxu0
      %v1296 = vadd.f32 0.0, %v1295
      %v1297 = vpop.f32.mrb[0].mxu0
      %1298 = vmatprep.mubr.bf16.mxu0 0
      %1299 = vmatmul.mubr.bf16.gmra.mrb[0].mxu0 %v1173
      %v1300 = vpop.f32.mrb[0].mxu0
      %v1301 = vadd.f32 0.0, %v1300
      %v1302 = vpop.f32.mrb[0].mxu0
      %v1303 = vpop.f32.mrb[0].mxu0
      %v1304 = vadd.f32 0.0, %v1303
      %v1305 = vpop.f32.mrb[0].mxu0
      %1306 = vmatprep.mubr.bf16.mxu0 0
      %1307 = vmatmul.mubr.bf16.gmra.mrb[0].mxu0 %v1174
      %v1308 = vpop.f32.mrb[0].mxu0
      %v1309 = vadd.f32 0.0, %v1308
      %v1310 = vpop.f32.mrb[0].mxu0
      %v1311 = vpop.f32.mrb[0].mxu0
      %v1312 = vadd.f32 0.0, %v1311
      %v1313 = vpop.f32.mrb[0].mxu0
      %1314 = vmatprep.mubr.bf16.mxu0 0
      %1315 = vmatmul.mubr.bf16.gmra.mrb[0].mxu0 %v1175
      %v1316 = vpop.f32.mrb[0].mxu0
      %v1317 = vadd.f32 0.0, %v1316
      %v1318 = vpop.f32.mrb[0].mxu0
      %v1319 = vpop.f32.mrb[0].mxu0
      %v1320 = vadd.f32 0.0, %v1319
      %v1321 = vpop.f32.mrb[0].mxu0
      %1322 = vmatprep.mubr.bf16.mxu0 0
      %1323 = vmatmul.mubr.bf16.gmra.mrb[0].mxu0 %v1176
      %v1324 = vpop.f32.mrb[0].mxu0
      %v1325 = vadd.f32 0.0, %v1324
      %v1326 = vpop.f32.mrb[0].mxu0
      %v1327 = vpop.f32.mrb[0].mxu0
      %v1328 = vadd.f32 0.0, %v1327
      %v1329 = vpop.f32.mrb[0].mxu0
      %1330 = vmatprep.mubr.bf16.mxu0 0
      %1331 = vmatmul.mubr.bf16.gmra.mrb[0].mxu0 %v1177
      %v1332 = vpop.f32.mrb[0].mxu0
      %v1333 = vadd.f32 0.0, %v1332
      %v1334 = vpop.f32.mrb[0].mxu0
      %v1335 = vpop.f32.mrb[0].mxu0
      %v1336 = vadd.f32 0.0, %v1335
      %v1337 = vpop.f32.mrb[0].mxu0
      %1338 = vdwg.mxu0
      %v1339 = vpack.c.bf16 %v1280, %v1277
      %v1340 = vpack.c.bf16 %v1288, %v1285
      %v1341 = vpack.c.bf16 %v1296, %v1293
      %v1342 = vpack.c.bf16 %v1304, %v1301
      %v1343 = vpack.c.bf16 %v1312, %v1309
      %v1344 = vpack.c.bf16 %v1320, %v1317
      %v1345 = vpack.c.bf16 %v1328, %v1325
      %v1346 = vpack.c.bf16 %v1336, %v1333
      %v1347 = vld [vmem:[%s2] sm:$0xf]
      %v1348 = vld [vmem:[%s2 + $0x4] sm:$0xf]
      %v1349 = vld [vmem:[%s2 + $0x8] sm:$0xf]
      %v1350 = vld [vmem:[%s2 + $0xc] sm:$0xf]
      %v1351 = vld [vmem:[%s2 + $0x10] sm:$0xf]
      %v1352 = vld [vmem:[%s2 + $0x14] sm:$0xf]
      %v1353 = vld [vmem:[%s2 + $0x18] sm:$0xf]
      %v1354 = vld [vmem:[%s2 + $0x1c] sm:$0xf]
      %v1355 = vld [vmem:[%s2 + $0x20] sm:$0xf]
      %v1356 = vld [vmem:[%s2 + $0x24] sm:$0xf]
      %v1357 = vld [vmem:[%s2 + $0x28] sm:$0xf]
      %v1358 = vld [vmem:[%s2 + $0x2c] sm:$0xf]
      %v1359 = vld [vmem:[%s2 + $0x30] sm:$0xf]
      %v1360 = vld [vmem:[%s2 + $0x34] sm:$0xf]
      %v1361 = vld [vmem:[%s2 + $0x38] sm:$0xf]
      %v1362 = vld [vmem:[%s2 + $0x3c] sm:$0xf]
      %v1363 = vld [vmem:[%s3] sm:$0x1]
      %v1365 = vlaneseq
      %v1366 = vshrl.u32 %v1365, 7
      %v1367 = vsub.s32 0, %v1366
      %v1368 = vrot.slane %v1363, %v1367
      %v1386 = vunpack.c.l.b16 %v1347
      %v1387 = vunpack.c.l.b16 %v1348
      %v1388 = vunpack.c.l.b16 %v1349
      %v1389 = vunpack.c.l.b16 %v1350
      %v1390 = vunpack.c.l.b16 %v1351
      %v1391 = vunpack.c.l.b16 %v1352
      %v1392 = vunpack.c.l.b16 %v1353
      %v1393 = vunpack.c.l.b16 %v1354
      %v1394 = vunpack.c.l.b16 %v1355
      %v1395 = vunpack.c.l.b16 %v1356
      %v1396 = vunpack.c.l.b16 %v1357
      %v1397 = vunpack.c.l.b16 %v1358
      %v1398 = vunpack.c.l.b16 %v1359
      %v1399 = vunpack.c.l.b16 %v1360
      %v1400 = vunpack.c.l.b16 %v1361
      %v1401 = vunpack.c.l.b16 %v1362
      %v1402 = vpack.c.b16 %v1387, %v1386
      %v1403 = vpack.c.b16 %v1389, %v1388
      %v1404 = vpack.c.b16 %v1391, %v1390
      %v1405 = vpack.c.b16 %v1393, %v1392
      %v1406 = vpack.c.b16 %v1395, %v1394
      %v1407 = vpack.c.b16 %v1397, %v1396
      %v1408 = vpack.c.b16 %v1399, %v1398
      %v1409 = vpack.c.b16 %v1401, %v1400
      %1418 = vmatprep.subr.bf16.mxu0 0
      %1419 = vmatpush1.bf16.msra.mxu0 %v1402
      %1420 = vmatprep.subr.bf16.mxu0 0
      %1421 = vmatpush1.bf16.msra.mxu0 %v1403
      %1422 = vmatprep.subr.bf16.mxu0 0
      %1423 = vmatpush1.bf16.msra.mxu0 %v1404
      %1424 = vmatprep.subr.bf16.mxu0 0
      %1425 = vmatpush1.bf16.msra.mxu0 %v1405
      %1426 = vmatprep.subr.bf16.mxu0 0
      %1427 = vmatpush1.bf16.msra.mxu0 %v1406
      %1428 = vmatprep.subr.bf16.mxu0 0
      %1429 = vmatpush1.bf16.msra.mxu0 %v1407
      %1430 = vmatprep.subr.bf16.mxu0 0
      %1431 = vmatpush1.bf16.msra.mxu0 %v1408
      %1432 = vmatprep.subr.bf16.mxu0 0
      %1433 = vmatpush1.bf16.msra.mxu0 %v1409
      %1434 = vmatprep.subr.bf16.mxu0 0
      %1435 = vmatpush1.bf16.msra.mxu0 0
      %1436 = vmatprep.subr.bf16.mxu0 0
      %1437 = vmatpush1.bf16.msra.mxu0 0
      %1438 = vmatprep.subr.bf16.mxu0 0
      %1439 = vmatpush1.bf16.msra.mxu0 0
      %1440 = vmatprep.subr.bf16.mxu0 0
      %1441 = vmatpush1.bf16.msra.mxu0 0
      %1442 = vmatprep.subr.bf16.mxu0 0
      %1443 = vmatpush1.bf16.msra.mxu0 0
      %1444 = vmatprep.subr.bf16.mxu0 0
      %1445 = vmatpush1.bf16.msra.mxu0 0
      %1446 = vmatprep.subr.bf16.mxu0 0
      %1447 = vmatpush1.bf16.msra.mxu0 0
      %1448 = vmatprep.subr.bf16.mxu0 0
      %1449 = vmatpush1.bf16.msra.mxu0 0
      %1450 = vmatprep.mubr.bf16.mxu0 0
      %1451 = vmatmul.mubr.bf16.gmra.mrb[0].mxu0 %v1339
      %v1452 = vpop.f32.mrb[0].mxu0
      %v1453 = vadd.f32 %v1368, %v1452
      %v1454 = vpop.f32.mrb[0].mxu0
      %v1455 = vpop.f32.mrb[0].mxu0
      %v1456 = vadd.f32 %v1368, %v1455
      %v1457 = vpop.f32.mrb[0].mxu0
      %1458 = vmatprep.mubr.bf16.mxu0 0
      %1459 = vmatmul.mubr.bf16.gmra.mrb[0].mxu0 %v1340
      %v1460 = vpop.f32.mrb[0].mxu0
      %v1461 = vadd.f32 %v1368, %v1460
      %v1462 = vpop.f32.mrb[0].mxu0
      %v1463 = vpop.f32.mrb[0].mxu0
      %v1464 = vadd.f32 %v1368, %v1463
      %v1465 = vpop.f32.mrb[0].mxu0
      %1466 = vmatprep.mubr.bf16.mxu0 0
      %1467 = vmatmul.mubr.bf16.gmra.mrb[0].mxu0 %v1341
      %v1468 = vpop.f32.mrb[0].mxu0
      %v1469 = vadd.f32 %v1368, %v1468
      %v1470 = vpop.f32.mrb[0].mxu0
      %v1471 = vpop.f32.mrb[0].mxu0
      %v1472 = vadd.f32 %v1368, %v1471
      %v1473 = vpop.f32.mrb[0].mxu0
      %1474 = vmatprep.mubr.bf16.mxu0 0
      %1475 = vmatmul.mubr.bf16.gmra.mrb[0].mxu0 %v1342
      %v1476 = vpop.f32.mrb[0].mxu0
      %v1477 = vadd.f32 %v1368, %v1476
      %v1478 = vpop.f32.mrb[0].mxu0
      %v1479 = vpop.f32.mrb[0].mxu0
      %v1480 = vadd.f32 %v1368, %v1479
      %v1481 = vpop.f32.mrb[0].mxu0
      %1482 = vmatprep.mubr.bf16.mxu0 0
      %1483 = vmatmul.mubr.bf16.gmra.mrb[0].mxu0 %v1343
      %v1484 = vpop.f32.mrb[0].mxu0
      %v1485 = vadd.f32 %v1368, %v1484
      %v1486 = vpop.f32.mrb[0].mxu0
      %v1487 = vpop.f32.mrb[0].mxu0
      %v1488 = vadd.f32 %v1368, %v1487
      %v1489 = vpop.f32.mrb[0].mxu0
      %1490 = vmatprep.mubr.bf16.mxu0 0
      %1491 = vmatmul.mubr.bf16.gmra.mrb[0].mxu0 %v1344
      %v1492 = vpop.f32.mrb[0].mxu0
      %v1493 = vadd.f32 %v1368, %v1492
      %v1494 = vpop.f32.mrb[0].mxu0
      %v1495 = vpop.f32.mrb[0].mxu0
      %v1496 = vadd.f32 %v1368, %v1495
      %v1497 = vpop.f32.mrb[0].mxu0
      %1498 = vmatprep.mubr.bf16.mxu0 0
      %1499 = vmatmul.mubr.bf16.gmra.mrb[0].mxu0 %v1345
      %v1500 = vpop.f32.mrb[0].mxu0
      %v1501 = vadd.f32 %v1368, %v1500
      %v1502 = vpop.f32.mrb[0].mxu0
      %v1503 = vpop.f32.mrb[0].mxu0
      %v1504 = vadd.f32 %v1368, %v1503
      %v1505 = vpop.f32.mrb[0].mxu0
      %1506 = vmatprep.mubr.bf16.mxu0 0
      %1507 = vmatmul.mubr.bf16.gmra.mrb[0].mxu0 %v1346
      %v1508 = vpop.f32.mrb[0].mxu0
      %v1509 = vadd.f32 %v1368, %v1508
      %v1510 = vpop.f32.mrb[0].mxu0
      %v1511 = vpop.f32.mrb[0].mxu0
      %v1512 = vadd.f32 %v1368, %v1511
      %v1513 = vpop.f32.mrb[0].mxu0
      %1514 = vdwg.mxu0
      %v1515 = vmax.f32 %v1453, 0.0
      %v1516 = vmax.f32 %v1456, 0.0
      %v1517 = vmax.f32 %v1461, 0.0
      %v1518 = vmax.f32 %v1464, 0.0
      %v1519 = vmax.f32 %v1469, 0.0
      %v1520 = vmax.f32 %v1472, 0.0
      %v1521 = vmax.f32 %v1477, 0.0
      %v1522 = vmax.f32 %v1480, 0.0
      %v1523 = vmax.f32 %v1485, 0.0
      %v1524 = vmax.f32 %v1488, 0.0
      %v1525 = vmax.f32 %v1493, 0.0
      %v1526 = vmax.f32 %v1496, 0.0
      %v1527 = vmax.f32 %v1501, 0.0
      %v1528 = vmax.f32 %v1504, 0.0
      %v1529 = vmax.f32 %v1509, 0.0
      %v1530 = vmax.f32 %v1512, 0.0
      %v1531 = vpack.c.bf16 %v1516, %v1515
      %v1532 = vpack.c.bf16 %v1518, %v1517
      %v1533 = vpack.c.bf16 %v1520, %v1519
      %v1534 = vpack.c.bf16 %v1522, %v1521
      %v1535 = vpack.c.bf16 %v1524, %v1523
      %v1536 = vpack.c.bf16 %v1526, %v1525
      %v1537 = vpack.c.bf16 %v1528, %v1527
      %v1538 = vpack.c.bf16 %v1530, %v1529
      %v1539 = vld [vmem:[%s4] sm:$0xf]
      %v1540 = vld [vmem:[%s4 + $0x4] sm:$0xf]
      %v1541 = vld [vmem:[%s4 + $0x8] sm:$0xf]
      %v1542 = vld [vmem:[%s4 + $0xc] sm:$0xf]
      %v1543 = vld [vmem:[%s4 + $0x10] sm:$0xf]
      %v1544 = vld [vmem:[%s4 + $0x14] sm:$0xf]
      %v1545 = vld [vmem:[%s4 + $0x18] sm:$0xf]
      %v1546 = vld [vmem:[%s4 + $0x1c] sm:$0xf]
      %v1547 = vld [vmem:[%s4 + $0x20] sm:$0xf]
      %v1548 = vld [vmem:[%s4 + $0x24] sm:$0xf]
      %v1549 = vld [vmem:[%s4 + $0x28] sm:$0xf]
      %v1550 = vld [vmem:[%s4 + $0x2c] sm:$0xf]
      %v1551 = vld [vmem:[%s4 + $0x30] sm:$0xf]
      %v1552 = vld [vmem:[%s4 + $0x34] sm:$0xf]
      %v1553 = vld [vmem:[%s4 + $0x38] sm:$0xf]
      %v1554 = vld [vmem:[%s4 + $0x3c] sm:$0xf]
      %v1555 = vld [vmem:[%s5] sm:$0x1]
      %v1557 = vlaneseq
      %v1558 = vshrl.u32 %v1557, 7
      %v1559 = vsub.s32 0, %v1558
      %v1560 = vrot.slane %v1555, %v1559
      %v1578 = vunpack.c.l.b16 %v1539
      %v1579 = vunpack.c.l.b16 %v1540
      %v1580 = vunpack.c.l.b16 %v1541
      %v1581 = vunpack.c.l.b16 %v1542
      %v1582 = vunpack.c.l.b16 %v1543
      %v1583 = vunpack.c.l.b16 %v1544
      %v1584 = vunpack.c.l.b16 %v1545
      %v1585 = vunpack.c.l.b16 %v1546
      %v1586 = vunpack.c.l.b16 %v1547
      %v1587 = vunpack.c.l.b16 %v1548
      %v1588 = vunpack.c.l.b16 %v1549
      %v1589 = vunpack.c.l.b16 %v1550
      %v1590 = vunpack.c.l.b16 %v1551
      %v1591 = vunpack.c.l.b16 %v1552
      %v1592 = vunpack.c.l.b16 %v1553
      %v1593 = vunpack.c.l.b16 %v1554
      %v1594 = vpack.c.b16 %v1579, %v1578
      %v1595 = vpack.c.b16 %v1581, %v1580
      %v1596 = vpack.c.b16 %v1583, %v1582
      %v1597 = vpack.c.b16 %v1585, %v1584
      %v1598 = vpack.c.b16 %v1587, %v1586
      %v1599 = vpack.c.b16 %v1589, %v1588
      %v1600 = vpack.c.b16 %v1591, %v1590
      %v1601 = vpack.c.b16 %v1593, %v1592
      %1610 = vmatprep.subr.bf16.mxu0 0
      %1611 = vmatpush1.bf16.msra.mxu0 %v1594
      %1612 = vmatprep.subr.bf16.mxu0 0
      %1613 = vmatpush1.bf16.msra.mxu0 %v1595
      %1614 = vmatprep.subr.bf16.mxu0 0
      %1615 = vmatpush1.bf16.msra.mxu0 %v1596
      %1616 = vmatprep.subr.bf16.mxu0 0
      %1617 = vmatpush1.bf16.msra.mxu0 %v1597
      %1618 = vmatprep.subr.bf16.mxu0 0
      %1619 = vmatpush1.bf16.msra.mxu0 %v1598
      %1620 = vmatprep.subr.bf16.mxu0 0
      %1621 = vmatpush1.bf16.msra.mxu0 %v1599
      %1622 = vmatprep.subr.bf16.mxu0 0
      %1623 = vmatpush1.bf16.msra.mxu0 %v1600
      %1624 = vmatprep.subr.bf16.mxu0 0
      %1625 = vmatpush1.bf16.msra.mxu0 %v1601
      %1626 = vmatprep.subr.bf16.mxu0 0
      %1627 = vmatpush1.bf16.msra.mxu0 0
      %1628 = vmatprep.subr.bf16.mxu0 0
      %1629 = vmatpush1.bf16.msra.mxu0 0
      %1630 = vmatprep.subr.bf16.mxu0 0
      %1631 = vmatpush1.bf16.msra.mxu0 0
      %1632 = vmatprep.subr.bf16.mxu0 0
      %1633 = vmatpush1.bf16.msra.mxu0 0
      %1634 = vmatprep.subr.bf16.mxu0 0
      %1635 = vmatpush1.bf16.msra.mxu0 0
      %1636 = vmatprep.subr.bf16.mxu0 0
      %1637 = vmatpush1.bf16.msra.mxu0 0
      %1638 = vmatprep.subr.bf16.mxu0 0
      %1639 = vmatpush1.bf16.msra.mxu0 0
      %1640 = vmatprep.subr.bf16.mxu0 0
      %1641 = vmatpush1.bf16.msra.mxu0 0
      %1642 = vmatprep.mubr.bf16.mxu0 0
      %1643 = vmatmul.mubr.bf16.gmra.mrb[0].mxu0 %v1531
      %v1644 = vpop.f32.mrb[0].mxu0
      %v1645 = vadd.f32 %v1560, %v1644
      %v1646 = vpop.f32.mrb[0].mxu0
      %v1647 = vpop.f32.mrb[0].mxu0
      %v1648 = vadd.f32 %v1560, %v1647
      %v1649 = vpop.f32.mrb[0].mxu0
      %1650 = vmatprep.mubr.bf16.mxu0 0
      %1651 = vmatmul.mubr.bf16.gmra.mrb[0].mxu0 %v1532
      %v1652 = vpop.f32.mrb[0].mxu0
      %v1653 = vadd.f32 %v1560, %v1652
      %v1654 = vpop.f32.mrb[0].mxu0
      %v1655 = vpop.f32.mrb[0].mxu0
      %v1656 = vadd.f32 %v1560, %v1655
      %v1657 = vpop.f32.mrb[0].mxu0
      %1658 = vmatprep.mubr.bf16.mxu0 0
      %1659 = vmatmul.mubr.bf16.gmra.mrb[0].mxu0 %v1533
      %v1660 = vpop.f32.mrb[0].mxu0
      %v1661 = vadd.f32 %v1560, %v1660
      %v1662 = vpop.f32.mrb[0].mxu0
      %v1663 = vpop.f32.mrb[0].mxu0
      %v1664 = vadd.f32 %v1560, %v1663
      %v1665 = vpop.f32.mrb[0].mxu0
      %1666 = vmatprep.mubr.bf16.mxu0 0
      %1667 = vmatmul.mubr.bf16.gmra.mrb[0].mxu0 %v1534
      %v1668 = vpop.f32.mrb[0].mxu0
      %v1669 = vadd.f32 %v1560, %v1668
      %v1670 = vpop.f32.mrb[0].mxu0
      %v1671 = vpop.f32.mrb[0].mxu0
      %v1672 = vadd.f32 %v1560, %v1671
      %v1673 = vpop.f32.mrb[0].mxu0
      %1674 = vmatprep.mubr.bf16.mxu0 0
      %1675 = vmatmul.mubr.bf16.gmra.mrb[0].mxu0 %v1535
      %v1676 = vpop.f32.mrb[0].mxu0
      %v1677 = vadd.f32 %v1560, %v1676
      %v1678 = vpop.f32.mrb[0].mxu0
      %v1679 = vpop.f32.mrb[0].mxu0
      %v1680 = vadd.f32 %v1560, %v1679
      %v1681 = vpop.f32.mrb[0].mxu0
      %1682 = vmatprep.mubr.bf16.mxu0 0
      %1683 = vmatmul.mubr.bf16.gmra.mrb[0].mxu0 %v1536
      %v1684 = vpop.f32.mrb[0].mxu0
      %v1685 = vadd.f32 %v1560, %v1684
      %v1686 = vpop.f32.mrb[0].mxu0
      %v1687 = vpop.f32.mrb[0].mxu0
      %v1688 = vadd.f32 %v1560, %v1687
      %v1689 = vpop.f32.mrb[0].mxu0
      %1690 = vmatprep.mubr.bf16.mxu0 0
      %1691 = vmatmul.mubr.bf16.gmra.mrb[0].mxu0 %v1537
      %v1692 = vpop.f32.mrb[0].mxu0
      %v1693 = vadd.f32 %v1560, %v1692
      %v1694 = vpop.f32.mrb[0].mxu0
      %v1695 = vpop.f32.mrb[0].mxu0
      %v1696 = vadd.f32 %v1560, %v1695
      %v1697 = vpop.f32.mrb[0].mxu0
      %1698 = vmatprep.mubr.bf16.mxu0 0
      %1699 = vmatmul.mubr.bf16.gmra.mrb[0].mxu0 %v1538
      %v1700 = vpop.f32.mrb[0].mxu0
      %v1701 = vadd.f32 %v1560, %v1700
      %v1702 = vpop.f32.mrb[0].mxu0
      %v1703 = vpop.f32.mrb[0].mxu0
      %v1704 = vadd.f32 %v1560, %v1703
      %v1705 = vpop.f32.mrb[0].mxu0
      %1706 = vdwg.mxu0
      %1707 = vst [vmem:[%s253] sm:$0xff] %v1645
      %1708 = vst [vmem:[%s253 + $0x8] sm:$0xff] %v1648
      %1709 = vst [vmem:[%s253 + $0x10] sm:$0xff] %v1653
      %1710 = vst [vmem:[%s253 + $0x18] sm:$0xff] %v1656
      %1711 = vst [vmem:[%s253 + $0x20] sm:$0xff] %v1661
      %1712 = vst [vmem:[%s253 + $0x28] sm:$0xff] %v1664
      %1713 = vst [vmem:[%s253 + $0x30] sm:$0xff] %v1669
      %1714 = vst [vmem:[%s253 + $0x38] sm:$0xff] %v1672
      %1715 = vst [vmem:[%s253 + $0x40] sm:$0xff] %v1677
      %1716 = vst [vmem:[%s253 + $0x48] sm:$0xff] %v1680
      %1717 = vst [vmem:[%s253 + $0x50] sm:$0xff] %v1685
      %1718 = vst [vmem:[%s253 + $0x58] sm:$0xff] %v1688
      %1719 = vst [vmem:[%s253 + $0x60] sm:$0xff] %v1693
      %1720 = vst [vmem:[%s253 + $0x68] sm:$0xff] %v1696
      %1721 = vst [vmem:[%s253 + $0x70] sm:$0xff] %v1701
      %1722 = vst [vmem:[%s253 + $0x78] sm:$0xff] %v1704
      %s1723 = smul.u32 16, %s17
      %p1724 = scmp.lt.s32.totalorder %s1723, 31
      %s1725 = scalar_select %p1724, %s1723, 31
      %s1726 = smul.addr %s1725, 8
      %s1727 = scalar_lea.vmem %s6, %s1726
      // Predicated region
      $region45: #{_forward.1} parent=43 // pred_check
        %p1728 = pneg %p166
      $region46: #{_forward.1} parent=43 // pred_check_branch
        %1730 = sbr.rel (%p1728) target = $region48
      $region47: #{_forward.1} parent=43 // pred_region
        %s1731 = smul.u32 16, %s17
      $region48: #{_forward.1} parent=43 // pred_fallthru
        _
    $region44: #{_forward.1} parent=5 // pred_fallthru
      _
    %p1732 = scmp.le.s32.totalorder 2, %s12
    // Predicated region
    $region49: #{_forward.1} parent=5 // pred_check
      %p1733 = pneg %p1732
    $region50: #{_forward.1} parent=5 // pred_check_branch
      %1735 = sbr.rel (%p1733) target = $region52
    $region51: #{_forward.1} parent=5 // pred_region
      %s1736 = ssub.s32 %s12, 2
      // Predicated region
      $region53: #{_forward.1} parent=51 // pred_check
        %p1737 = pneg %p172
      $region54: #{_forward.1} parent=51 // pred_check_branch
        %1739 = sbr.rel (%p1737) target = $region56
      $region55: #{_forward.1} parent=51 // pred_region
        %s1740 = smul.u32 16, %s18
        %p1741 = scmp.lt.s32.totalorder %s1740, 31
        %s1742 = scalar_select %p1741, %s1740, 31
        %s1743 = smul.addr %s1742, 8
        %s1744 = scalar_lea.vmem %s6, %s1743
      $region56: #{_forward.1} parent=51 // pred_fallthru
        _
    $region52: #{_forward.1} parent=5 // pred_fallthru
      _
  $region6: #{_forward.1} parent=0 // loop_footer
    %s16 = sadd.s32 1, %s12
  $region7: #{_forward.1} parent=0 // loop_footer_branch
    %11 = sbr.rel target = $region3
  $region8: #{_forward.1} parent=0 // loop_exit
    _

</llo_original>
